<compile_context>
chip_gen: v5e
topology: v5e:2x2
jax: 0.10.0
libtpu: 0.0.40
codegen_flags: <defaults>
</compile_context>

<pallas_src>
import functools
import math

import jax
import jax.numpy as jnp
from jax.experimental import pallas as pl
from jax.experimental.pallas import tpu as pltpu

MAX = 10000.0  # signature parity with the original PositionalEncodingTF


# ----------------------------- kernel helpers ------------------------------ #

def _layer_norm(v, w, b, eps=1e-5):
    mu = jnp.mean(v, axis=-1, keepdims=True)
    var = jnp.mean(jnp.square(v - mu), axis=-1, keepdims=True)
    return (v - mu) * jax.lax.rsqrt(var + eps) * w + b


# ------------------------------- the kernel -------------------------------- #
#
# Packed-parameter layouts (all weights pre-transposed for `x @ W`):
#   win  : (n_layers, d_z, 8*d_z + dff)
#     cols [0      : 3*d_z      ]  self-attn in_proj  (q|k|v)
#     cols [3*d_z  : 6*d_z      ]  cross-attn in_proj (q|k|v)
#     cols [6*d_z  : 7*d_z      ]  self-attn out_proj
#     cols [7*d_z  : 8*d_z      ]  cross-attn out_proj
#     cols [8*d_z  : 8*d_z + dff]  FFN linear1
#   wff2 : (n_layers, dff, d_z)     FFN linear2
#   wtp  : (d_z, 2)                 time_prob_net linear
#   bias : (12*n_layers + 1, 3*d_z) rows, zero-padded to width 3*d_z:
#     per layer l (base r = 12*l):
#       r+0 sa_in_b(3dz)  r+1 ca_in_b(3dz)  r+2 sa_out_b  r+3 ca_out_b
#       r+4 ff1_b         r+5 ff2_b
#       r+6..8  ln_w (post-sa / post-ca / post-ff)
#       r+9..11 ln_b (post-sa / post-ca / post-ff)
#     last row: time_prob bias (width 2)

def _maskgen_kernel(x_ref, mem_ref, g_ref, win_ref, wff2_ref, wtp_ref, bias_ref,
                    out_ref, *, n_layers):
    B, T, d_z = x_ref.shape
    Tm = mem_ref.shape[1]
    dff = wff2_ref.shape[1]
    scale = 1.0 / math.sqrt(d_z)

    x = x_ref[...]                      # (B, T, d_z)   tgt = cat([src, pos_enc], -1)
    mem = mem_ref[...]                  # (B, Tm, d_z)  memory = z_seq
    g = g_ref[...]                      # (B, T, 2)     pre-sampled Gumbel(0, 1) noise
    bias = bias_ref[...]                # (12*n_layers + 1, 3*d_z)
    wtp = wtp_ref[...]                  # (d_z, 2)

    h = x.reshape(B * T, d_z)
    mem_f = mem.reshape(B * Tm, d_z)

    # --- nn.TransformerDecoder: post-LN, ReLU FFN, nhead=1, dropout off ---
    for l in range(n_layers):
        w = win_ref[l]                  # (d_z, 8*d_z + dff)
        w2 = wff2_ref[l]                # (dff, d_z)
        r = 12 * l

        # self-attention (fused QKV projection)
        qkv = jnp.dot(h, w[:, 0:3 * d_z],
                      preferred_element_type=jnp.float32) + bias[r:r + 1, 0:3 * d_z]
        q = qkv[:, 0:d_z].reshape(B, T, d_z)
        k = qkv[:, d_z:2 * d_z].reshape(B, T, d_z)
        v = qkv[:, 2 * d_z:3 * d_z].reshape(B, T, d_z)
        s = jnp.einsum('bqd,bkd->bqk', q, k,
                       preferred_element_type=jnp.float32) * scale
        a = jax.nn.softmax(s, axis=-1)
        o = jnp.einsum('bqk,bkd->bqd', a, v,
                       preferred_element_type=jnp.float32).reshape(B * T, d_z)
        sa = jnp.dot(o, w[:, 6 * d_z:7 * d_z],
                     preferred_element_type=jnp.float32) + bias[r + 2:r + 3, 0:d_z]
        h = _layer_norm(h + sa, bias[r + 6:r + 7, 0:d_z], bias[r + 9:r + 10, 0:d_z])

        # cross-attention (Q from h, fused KV from memory)
        q2 = jnp.dot(h, w[:, 3 * d_z:4 * d_z],
                     preferred_element_type=jnp.float32) + bias[r + 1:r + 2, 0:d_z]
        kv2 = jnp.dot(mem_f, w[:, 4 * d_z:6 * d_z],
                      preferred_element_type=jnp.float32) + bias[r + 1:r + 2, d_z:3 * d_z]
        q2 = q2.reshape(B, T, d_z)
        k2 = kv2[:, 0:d_z].reshape(B, Tm, d_z)
        v2 = kv2[:, d_z:2 * d_z].reshape(B, Tm, d_z)
        s2 = jnp.einsum('bqd,bkd->bqk', q2, k2,
                        preferred_element_type=jnp.float32) * scale
        a2 = jax.nn.softmax(s2, axis=-1)
        o2 = jnp.einsum('bqk,bkd->bqd', a2, v2,
                        preferred_element_type=jnp.float32).reshape(B * T, d_z)
        ca = jnp.dot(o2, w[:, 7 * d_z:8 * d_z],
                     preferred_element_type=jnp.float32) + bias[r + 3:r + 4, 0:d_z]
        h = _layer_norm(h + ca, bias[r + 7:r + 8, 0:d_z], bias[r + 10:r + 11, 0:d_z])

        # FFN
        hid = jnp.maximum(
            jnp.dot(h, w[:, 8 * d_z:8 * d_z + dff],
                    preferred_element_type=jnp.float32) + bias[r + 4:r + 5, 0:dff], 0.0)
        ff = jnp.dot(hid, w2, preferred_element_type=jnp.float32) + bias[r + 5:r + 6, 0:d_z]
        h = _layer_norm(h + ff, bias[r + 8:r + 9, 0:d_z], bias[r + 11:r + 12, 0:d_z])

    # --- time_prob head + softmax mask + hard Gumbel-softmax (forward) ---
    rt = 12 * n_layers
    p_time = jnp.dot(h, wtp, preferred_element_type=jnp.float32) + bias[rt:rt + 1, 0:2]
    p_diff = (p_time[:, 1:2] - p_time[:, 0:1]).reshape(B, T, 1)
    mask = jax.nn.sigmoid(p_diff)                       # == softmax(p_time)[..., 1]
    # argmax of (log(softmax(p)+1e-9)+g)/tau  ==  argmax of (p + g)  (tau>0,
    # shared logsumexp; the 1e-9 fudge only matters on exact ties).
    gdiff = g[:, :, 0:1] - g[:, :, 1:2]
    reparam = (p_diff > gdiff).astype(jnp.float32)
    out_ref[...] = jnp.concatenate([mask, reparam], axis=-1)   # (B, T, 2)


# --------------------------- glue / parameter setup ------------------------- #

def positional_encoding_tf(times, d_pe, max_len):
    num_ts = d_pe // 2
    timescales = float(max_len) ** jnp.linspace(0.0, 1.0, num_ts)
    scaled = times[..., None].astype(jnp.float32) / timescales[None, None, :]
    return jnp.concatenate([jnp.sin(scaled), jnp.cos(scaled)], axis=-1)


def init_params(key, d_z, dim_feedforward=32, n_layers=2):
    def uni(k, shape, fan_in):
        lim = 1.0 / math.sqrt(fan_in)
        return jax.random.uniform(k, shape, jnp.float32, -lim, lim)

    ks = iter(jax.random.split(key, 16))
    p = {}
    p["sa_in_w"] = uni(next(ks), (n_layers, 3 * d_z, d_z), d_z)
    p["sa_in_b"] = jnp.zeros((n_layers, 3 * d_z), jnp.float32)
    p["sa_out_w"] = uni(next(ks), (n_layers, d_z, d_z), d_z)
    p["sa_out_b"] = jnp.zeros((n_layers, d_z), jnp.float32)
    p["ca_in_w"] = uni(next(ks), (n_layers, 3 * d_z, d_z), d_z)
    p["ca_in_b"] = jnp.zeros((n_layers, 3 * d_z), jnp.float32)
    p["ca_out_w"] = uni(next(ks), (n_layers, d_z, d_z), d_z)
    p["ca_out_b"] = jnp.zeros((n_layers, d_z), jnp.float32)
    p["ff1_w"] = uni(next(ks), (n_layers, dim_feedforward, d_z), d_z)
    p["ff1_b"] = uni(next(ks), (n_layers, dim_feedforward), d_z)
    p["ff2_w"] = uni(next(ks), (n_layers, d_z, dim_feedforward), dim_feedforward)
    p["ff2_b"] = uni(next(ks), (n_layers, d_z), dim_feedforward)
    p["ln_w"] = jnp.ones((3 * n_layers, d_z), jnp.float32)
    p["ln_b"] = jnp.zeros((3 * n_layers, d_z), jnp.float32)
    p["tp_w"] = uni(next(ks), (2, d_z), d_z)
    p["tp_b"] = uni(next(ks), (1, 2), d_z)
    return p


def pack_params(params, n_layers, d_z, dff):
    """Pre-transpose and pack the module parameters into 4 dense slabs."""
    win_layers, wff2_layers, bias_rows = [], [], []
    pad_w = 3 * d_z

    def pad(v):
        return jnp.pad(v, (0, pad_w - v.shape[0]))

    for l in range(n_layers):
        win_layers.append(jnp.concatenate([
            params["sa_in_w"][l].T,     # (d_z, 3*d_z)
            params["ca_in_w"][l].T,     # (d_z, 3*d_z)
            params["sa_out_w"][l].T,    # (d_z, d_z)
            params["ca_out_w"][l].T,    # (d_z, d_z)
            params["ff1_w"][l].T,       # (d_z, dff)
        ], axis=1))
        wff2_layers.append(params["ff2_w"][l].T)    # (dff, d_z)
        bias_rows += [
            params["sa_in_b"][l], params["ca_in_b"][l],
            pad(params["sa_out_b"][l]), pad(params["ca_out_b"][l]),
            pad(params["ff1_b"][l]), pad(params["ff2_b"][l]),
            pad(params["ln_w"][3 * l]), pad(params["ln_w"][3 * l + 1]),
            pad(params["ln_w"][3 * l + 2]),
            pad(params["ln_b"][3 * l]), pad(params["ln_b"][3 * l + 1]),
            pad(params["ln_b"][3 * l + 2]),
        ]
    bias_rows.append(pad(params["tp_b"][0]))

    win = jnp.stack(win_layers)          # (n_layers, d_z, 8*d_z + dff)
    wff2 = jnp.stack(wff2_layers)        # (n_layers, dff, d_z)
    bias = jnp.stack(bias_rows)          # (12*n_layers + 1, 3*d_z)
    wtp = params["tp_w"].T               # (d_z, 2)
    return win, wff2, bias, wtp


def mask_gen_stochastic_decoder_forward(z_seq, src, times, params, gumbel_key,
                                        d_pe=16, max_len=None, tau=1.0,
                                        n_layers=2):
    """z_seq: (Tm, B, d_z); src: (T, B, d_z - d_pe); times: (T, B)."""
    del tau  # hard (hard=True) Gumbel forward is invariant to tau > 0
    T, B, _ = src.shape
    Tm, _, d_z = z_seq.shape
    if max_len is None:
        max_len = T
    dff = params["ff1_w"].shape[1]

    pe = positional_encoding_tf(times, d_pe, max_len)     # (T, B, d_pe)
    x = jnp.concatenate([src, pe], axis=-1)               # (T, B, d_z)

    x_b = jnp.transpose(x, (1, 0, 2))                     # (B, T, d_z)
    mem_b = jnp.transpose(z_seq, (1, 0, 2))               # (B, Tm, d_z)
    gumbel = jax.random.gumbel(gumbel_key, (B, T, 2), jnp.float32)

    win, wff2, bias, wtp = pack_params(params, n_layers, d_z, dff)

    inputs = (x_b, mem_b, gumbel, win, wff2, wtp, bias)
    in_specs = [
        pl.BlockSpec(a.shape, functools.partial(lambda nd, i: (0,) * nd, a.ndim))
        for a in inputs
    ]
    out_spec = pl.BlockSpec((B, T, 2), lambda i: (0, 0, 0))

    kernel = functools.partial(_maskgen_kernel, n_layers=n_layers)
    out = pl.pallas_call(
        kernel,
        out_shape=jax.ShapeDtypeStruct((B, T, 2), jnp.float32),
        grid_spec=pltpu.PrefetchScalarGridSpec(
            num_scalar_prefetch=0,
            grid=(1,),                       # whole problem resident in one step
            in_specs=in_specs,
            out_specs=out_spec),
        compiler_params=pltpu.CompilerParams(
            dimension_semantics=("arbitrary",)),
    )(*inputs)

    total_mask = out[:, :, 0]                      # (B, T)  softmax(p_time)[..., 1]
    total_mask_reparameterize = out[:, :, 1]       # (B, T)  hard Gumbel forward
    p = jnp.zeros((B,), jnp.float32) + 1e-9        # trend_smoother=False branch
    smooth_src = src                               # trend_smoother=False
    return smooth_src, total_mask, total_mask_reparameterize, p


# ----------------------------------- main ----------------------------------- #

if __name__ == "__main__":
    key = jax.random.PRNGKey(0)
    k_src, k_z, k_par, k_gum = jax.random.split(key, 4)

    d_z, d_pe = 32, 16
    T, Tm, B = 8, 8, 2
    d_src = d_z - d_pe
    max_len = T

    src = jax.random.normal(k_src, (T, B, d_src), jnp.float32)
    times = jnp.tile(jnp.arange(1, T + 1, dtype=jnp.float32)[:, None], (1, B))
    z_seq = jax.random.normal(k_z, (Tm, B, d_z), jnp.float32)
    params = init_params(k_par, d_z)

    out = mask_gen_stochastic_decoder_forward(
        z_seq, src, times, params, k_gum, d_pe=d_pe, max_len=max_len, tau=1.0)
    out = jax.block_until_ready(out)

    smooth_src, total_mask, total_mask_reparameterize, p = out
    assert smooth_src.shape == (T, B, d_src)
    assert total_mask.shape == (B, T)
    assert total_mask_reparameterize.shape == (B, T)
    assert p.shape == (B,)
    assert bool(jnp.all(jnp.isfinite(total_mask)))
    assert bool(jnp.all((total_mask_reparameterize == 0.0)
                        | (total_mask_reparameterize == 1.0)))
    print("KERNEL_OK")
</pallas_src>

<mosaic_0001>
module attributes {stable_mosaic.version = 11 : i64} {
  func.func @_maskgen_kernel(%arg0: i32, %arg1: memref<2x8x32xf32, #tpu.memory_space<vmem>>, %arg2: memref<2x8x32xf32, #tpu.memory_space<vmem>>, %arg3: memref<2x8x2xf32, #tpu.memory_space<vmem>>, %arg4: memref<2x32x288xf32, #tpu.memory_space<vmem>>, %arg5: memref<2x32x32xf32, #tpu.memory_space<vmem>>, %arg6: memref<32x2xf32, #tpu.memory_space<vmem>>, %arg7: memref<25x96xf32, #tpu.memory_space<vmem>>, %arg8: memref<2x8x2xf32, #tpu.memory_space<vmem>>) attributes {dimension_semantics = [#tpu.dimension_semantics<arbitrary>], iteration_bounds = array<i64: 1>, scalar_prefetch = 0 : i64, scratch_operands = 0 : i64, tpu.core_type = #tpu.core_type<tc>, window_params = [{pipeline_mode = #tpu.pipeline_mode<synchronous>, transform_indices = @transform_0, window_bounds = array<i64: 2, 8, 32>}, {pipeline_mode = #tpu.pipeline_mode<synchronous>, transform_indices = @transform_1, window_bounds = array<i64: 2, 8, 32>}, {pipeline_mode = #tpu.pipeline_mode<synchronous>, transform_indices = @transform_2, window_bounds = array<i64: 2, 8, 2>}, {pipeline_mode = #tpu.pipeline_mode<synchronous>, transform_indices = @transform_3, window_bounds = array<i64: 2, 32, 288>}, {pipeline_mode = #tpu.pipeline_mode<synchronous>, transform_indices = @transform_4, window_bounds = array<i64: 2, 32, 32>}, {pipeline_mode = #tpu.pipeline_mode<synchronous>, transform_indices = @transform_5, window_bounds = array<i64: 32, 2>}, {pipeline_mode = #tpu.pipeline_mode<synchronous>, transform_indices = @transform_6, window_bounds = array<i64: 25, 96>}, {pipeline_mode = #tpu.pipeline_mode<synchronous>, transform_indices = @transform_7, window_bounds = array<i64: 2, 8, 2>}]} {
    %c0 = arith.constant 0 : index
    %c0_0 = arith.constant 0 : index
    %c0_1 = arith.constant 0 : index
    %0 = vector.load %arg1[%c0, %c0_0, %c0_1] : memref<2x8x32xf32, #tpu.memory_space<vmem>>, vector<2x8x32xf32>
    %c0_2 = arith.constant 0 : index
    %c0_3 = arith.constant 0 : index
    %c0_4 = arith.constant 0 : index
    %1 = vector.load %arg2[%c0_2, %c0_3, %c0_4] : memref<2x8x32xf32, #tpu.memory_space<vmem>>, vector<2x8x32xf32>
    %c0_5 = arith.constant 0 : index
    %c0_6 = arith.constant 0 : index
    %c0_7 = arith.constant 0 : index
    %2 = vector.load %arg3[%c0_5, %c0_6, %c0_7] : memref<2x8x2xf32, #tpu.memory_space<vmem>>, vector<2x8x2xf32>
    %c0_8 = arith.constant 0 : index
    %c0_9 = arith.constant 0 : index
    %3 = vector.load %arg7[%c0_8, %c0_9] : memref<25x96xf32, #tpu.memory_space<vmem>>, vector<25x96xf32>
    %c0_10 = arith.constant 0 : index
    %c0_11 = arith.constant 0 : index
    %4 = vector.load %arg6[%c0_10, %c0_11] : memref<32x2xf32, #tpu.memory_space<vmem>>, vector<32x2xf32>
    %5 = vector.shape_cast %0 : vector<2x8x32xf32> to vector<16x32xf32>
    %6 = vector.shape_cast %1 : vector<2x8x32xf32> to vector<16x32xf32>
    %c0_12 = arith.constant 0 : index
    %c0_13 = arith.constant 0 : index
    %c0_14 = arith.constant 0 : index
    %7 = vector.load %arg4[%c0_12, %c0_13, %c0_14] : memref<2x32x288xf32, #tpu.memory_space<vmem>>, vector<1x32x288xf32>
    %8 = vector.shape_cast %7 : vector<1x32x288xf32> to vector<32x288xf32>
    %c0_15 = arith.constant 0 : index
    %c0_16 = arith.constant 0 : index
    %c0_17 = arith.constant 0 : index
    %9 = vector.load %arg5[%c0_15, %c0_16, %c0_17] : memref<2x32x32xf32, #tpu.memory_space<vmem>>, vector<1x32x32xf32>
    %10 = vector.shape_cast %9 : vector<1x32x32xf32> to vector<32x32xf32>
    %11 = vector.extract_strided_slice %8 {offsets = [0, 0], sizes = [32, 96], strides = [1, 1]} : vector<32x288xf32> to vector<32x96xf32>
    %cst = arith.constant dense<0.000000e+00> : vector<16x96xf32>
    %12 = tpu.matmul %5, %11, %cst {dimension_numbers = #tpu.dot_dimension_numbers<[1], [0], [0], [1], [0, 0, 1, 1], [], []>} : vector<16x32xf32>, vector<32x96xf32>, vector<16x96xf32> -> vector<16x96xf32>
    %13 = vector.extract_strided_slice %3 {offsets = [0, 0], sizes = [1, 96], strides = [1, 1]} : vector<25x96xf32> to vector<1x96xf32>
    %14 = vector.broadcast %13 : vector<1x96xf32> to vector<16x96xf32>
    %15 = arith.addf %12, %14 : vector<16x96xf32>
    %16 = vector.extract_strided_slice %15 {offsets = [0, 0], sizes = [16, 32], strides = [1, 1]} : vector<16x96xf32> to vector<16x32xf32>
    %17 = vector.shape_cast %16 : vector<16x32xf32> to vector<2x8x32xf32>
    %18 = vector.extract_strided_slice %15 {offsets = [0, 32], sizes = [16, 32], strides = [1, 1]} : vector<16x96xf32> to vector<16x32xf32>
    %19 = vector.shape_cast %18 : vector<16x32xf32> to vector<2x8x32xf32>
    %20 = vector.extract_strided_slice %15 {offsets = [0, 64], sizes = [16, 32], strides = [1, 1]} : vector<16x96xf32> to vector<16x32xf32>
    %21 = vector.shape_cast %20 : vector<16x32xf32> to vector<2x8x32xf32>
    "tpu.trace_start"() <{level = 10 : i32, message = "bqd,bkd->bqk"}> : () -> ()
    %cst_18 = arith.constant dense<0.000000e+00> : vector<2x8x8xf32>
    %22 = tpu.matmul %17, %19, %cst_18 {dimension_numbers = #tpu.dot_dimension_numbers<[2], [2], [1], [1], [0, 0, 0, 1, 1, 1], [0], [0]>} : vector<2x8x32xf32>, vector<2x8x32xf32>, vector<2x8x8xf32> -> vector<2x8x8xf32>
    "tpu.trace_stop"() : () -> ()
    %cst_19 = arith.constant 0.176776692 : f32
    %23 = vector.broadcast %cst_19 : f32 to vector<2x8x8xf32>
    %24 = arith.mulf %22, %23 : vector<2x8x8xf32>
    %cst_20 = arith.constant dense<0xFF800000> : vector<2x8xf32>
    %25 = vector.multi_reduction <maximumf>, %24, %cst_20 [2] : vector<2x8x8xf32> to vector<2x8xf32>
    %cst_21 = arith.constant 0xFF800000 : f32
    %26 = vector.broadcast %cst_21 : f32 to vector<2x8xf32>
    %27 = arith.maximumf %26, %25 : vector<2x8xf32>
    %28 = vector.shape_cast %27 : vector<2x8xf32> to vector<2x8x1xf32>
    %29 = vector.broadcast %28 : vector<2x8x1xf32> to vector<2x8x8xf32>
    %30 = arith.subf %24, %29 : vector<2x8x8xf32>
    %31 = math.exp %30 : vector<2x8x8xf32>
    %cst_22 = arith.constant dense<0.000000e+00> : vector<2x8xf32>
    %32 = vector.multi_reduction <add>, %31, %cst_22 [2] : vector<2x8x8xf32> to vector<2x8xf32>
    %33 = vector.shape_cast %32 : vector<2x8xf32> to vector<2x8x1xf32>
    %34 = vector.broadcast %33 : vector<2x8x1xf32> to vector<2x8x8xf32>
    %35 = arith.divf %31, %34 : vector<2x8x8xf32>
    "tpu.trace_start"() <{level = 10 : i32, message = "bqk,bkd->bqd"}> : () -> ()
    %cst_23 = arith.constant dense<0.000000e+00> : vector<2x8x32xf32>
    %36 = tpu.matmul %35, %21, %cst_23 {dimension_numbers = #tpu.dot_dimension_numbers<[2], [1], [1], [2], [0, 0, 0, 1, 1, 2], [0], [0]>} : vector<2x8x8xf32>, vector<2x8x32xf32>, vector<2x8x32xf32> -> vector<2x8x32xf32>
    "tpu.trace_stop"() : () -> ()
    %37 = vector.shape_cast %36 : vector<2x8x32xf32> to vector<16x32xf32>
    %38 = vector.extract_strided_slice %8 {offsets = [0, 192], sizes = [32, 32], strides = [1, 1]} : vector<32x288xf32> to vector<32x32xf32>
    %cst_24 = arith.constant dense<0.000000e+00> : vector<16x32xf32>
    %39 = tpu.matmul %37, %38, %cst_24 {dimension_numbers = #tpu.dot_dimension_numbers<[1], [0], [0], [1], [0, 0, 1, 1], [], []>} : vector<16x32xf32>, vector<32x32xf32>, vector<16x32xf32> -> vector<16x32xf32>
    %40 = vector.extract_strided_slice %3 {offsets = [2, 0], sizes = [1, 32], strides = [1, 1]} : vector<25x96xf32> to vector<1x32xf32>
    %41 = vector.broadcast %40 : vector<1x32xf32> to vector<16x32xf32>
    %42 = arith.addf %39, %41 : vector<16x32xf32>
    %43 = arith.addf %5, %42 : vector<16x32xf32>
    %44 = vector.extract_strided_slice %3 {offsets = [6, 0], sizes = [1, 32], strides = [1, 1]} : vector<25x96xf32> to vector<1x32xf32>
    %45 = vector.extract_strided_slice %3 {offsets = [9, 0], sizes = [1, 32], strides = [1, 1]} : vector<25x96xf32> to vector<1x32xf32>
    %cst_25 = arith.constant dense<0.000000e+00> : vector<16xf32>
    %46 = vector.multi_reduction <add>, %43, %cst_25 [1] : vector<16x32xf32> to vector<16xf32>
    %47 = vector.shape_cast %46 : vector<16xf32> to vector<16x1xf32>
    %cst_26 = arith.constant 3.200000e+01 : f32
    %48 = vector.broadcast %cst_26 : f32 to vector<16x1xf32>
    %49 = arith.divf %47, %48 : vector<16x1xf32>
    %50 = vector.broadcast %49 : vector<16x1xf32> to vector<16x32xf32>
    %51 = arith.subf %43, %50 : vector<16x32xf32>
    %52 = arith.mulf %51, %51 : vector<16x32xf32>
    %cst_27 = arith.constant dense<0.000000e+00> : vector<16xf32>
    %53 = vector.multi_reduction <add>, %52, %cst_27 [1] : vector<16x32xf32> to vector<16xf32>
    %54 = vector.shape_cast %53 : vector<16xf32> to vector<16x1xf32>
    %cst_28 = arith.constant 3.200000e+01 : f32
    %55 = vector.broadcast %cst_28 : f32 to vector<16x1xf32>
    %56 = arith.divf %54, %55 : vector<16x1xf32>
    %57 = vector.broadcast %49 : vector<16x1xf32> to vector<16x32xf32>
    %58 = arith.subf %43, %57 : vector<16x32xf32>
    %cst_29 = arith.constant 9.99999974E-6 : f32
    %59 = vector.broadcast %cst_29 : f32 to vector<16x1xf32>
    %60 = arith.addf %56, %59 : vector<16x1xf32>
    %61 = math.rsqrt %60 : vector<16x1xf32>
    %62 = vector.broadcast %61 : vector<16x1xf32> to vector<16x32xf32>
    %63 = arith.mulf %58, %62 : vector<16x32xf32>
    %64 = vector.broadcast %44 : vector<1x32xf32> to vector<16x32xf32>
    %65 = arith.mulf %63, %64 : vector<16x32xf32>
    %66 = vector.broadcast %45 : vector<1x32xf32> to vector<16x32xf32>
    %67 = arith.addf %65, %66 : vector<16x32xf32>
    %68 = vector.extract_strided_slice %8 {offsets = [0, 96], sizes = [32, 32], strides = [1, 1]} : vector<32x288xf32> to vector<32x32xf32>
    %cst_30 = arith.constant dense<0.000000e+00> : vector<16x32xf32>
    %69 = tpu.matmul %67, %68, %cst_30 {dimension_numbers = #tpu.dot_dimension_numbers<[1], [0], [0], [1], [0, 0, 1, 1], [], []>} : vector<16x32xf32>, vector<32x32xf32>, vector<16x32xf32> -> vector<16x32xf32>
    %70 = vector.extract_strided_slice %3 {offsets = [1, 0], sizes = [1, 32], strides = [1, 1]} : vector<25x96xf32> to vector<1x32xf32>
    %71 = vector.broadcast %70 : vector<1x32xf32> to vector<16x32xf32>
    %72 = arith.addf %69, %71 : vector<16x32xf32>
    %73 = vector.extract_strided_slice %8 {offsets = [0, 128], sizes = [32, 64], strides = [1, 1]} : vector<32x288xf32> to vector<32x64xf32>
    %cst_31 = arith.constant dense<0.000000e+00> : vector<16x64xf32>
    %74 = tpu.matmul %6, %73, %cst_31 {dimension_numbers = #tpu.dot_dimension_numbers<[1], [0], [0], [1], [0, 0, 1, 1], [], []>} : vector<16x32xf32>, vector<32x64xf32>, vector<16x64xf32> -> vector<16x64xf32>
    %75 = vector.extract_strided_slice %3 {offsets = [1, 32], sizes = [1, 64], strides = [1, 1]} : vector<25x96xf32> to vector<1x64xf32>
    %76 = vector.broadcast %75 : vector<1x64xf32> to vector<16x64xf32>
    %77 = arith.addf %74, %76 : vector<16x64xf32>
    %78 = vector.shape_cast %72 : vector<16x32xf32> to vector<2x8x32xf32>
    %79 = vector.extract_strided_slice %77 {offsets = [0, 0], sizes = [16, 32], strides = [1, 1]} : vector<16x64xf32> to vector<16x32xf32>
    %80 = vector.shape_cast %79 : vector<16x32xf32> to vector<2x8x32xf32>
    %81 = vector.extract_strided_slice %77 {offsets = [0, 32], sizes = [16, 32], strides = [1, 1]} : vector<16x64xf32> to vector<16x32xf32>
    %82 = vector.shape_cast %81 : vector<16x32xf32> to vector<2x8x32xf32>
    "tpu.trace_start"() <{level = 10 : i32, message = "bqd,bkd->bqk"}> : () -> ()
    %cst_32 = arith.constant dense<0.000000e+00> : vector<2x8x8xf32>
    %83 = tpu.matmul %78, %80, %cst_32 {dimension_numbers = #tpu.dot_dimension_numbers<[2], [2], [1], [1], [0, 0, 0, 1, 1, 1], [0], [0]>} : vector<2x8x32xf32>, vector<2x8x32xf32>, vector<2x8x8xf32> -> vector<2x8x8xf32>
    "tpu.trace_stop"() : () -> ()
    %cst_33 = arith.constant 0.176776692 : f32
    %84 = vector.broadcast %cst_33 : f32 to vector<2x8x8xf32>
    %85 = arith.mulf %83, %84 : vector<2x8x8xf32>
    %cst_34 = arith.constant dense<0xFF800000> : vector<2x8xf32>
    %86 = vector.multi_reduction <maximumf>, %85, %cst_34 [2] : vector<2x8x8xf32> to vector<2x8xf32>
    %cst_35 = arith.constant 0xFF800000 : f32
    %87 = vector.broadcast %cst_35 : f32 to vector<2x8xf32>
    %88 = arith.maximumf %87, %86 : vector<2x8xf32>
    %89 = vector.shape_cast %88 : vector<2x8xf32> to vector<2x8x1xf32>
    %90 = vector.broadcast %89 : vector<2x8x1xf32> to vector<2x8x8xf32>
    %91 = arith.subf %85, %90 : vector<2x8x8xf32>
    %92 = math.exp %91 : vector<2x8x8xf32>
    %cst_36 = arith.constant dense<0.000000e+00> : vector<2x8xf32>
    %93 = vector.multi_reduction <add>, %92, %cst_36 [2] : vector<2x8x8xf32> to vector<2x8xf32>
    %94 = vector.shape_cast %93 : vector<2x8xf32> to vector<2x8x1xf32>
    %95 = vector.broadcast %94 : vector<2x8x1xf32> to vector<2x8x8xf32>
    %96 = arith.divf %92, %95 : vector<2x8x8xf32>
    "tpu.trace_start"() <{level = 10 : i32, message = "bqk,bkd->bqd"}> : () -> ()
    %cst_37 = arith.constant dense<0.000000e+00> : vector<2x8x32xf32>
    %97 = tpu.matmul %96, %82, %cst_37 {dimension_numbers = #tpu.dot_dimension_numbers<[2], [1], [1], [2], [0, 0, 0, 1, 1, 2], [0], [0]>} : vector<2x8x8xf32>, vector<2x8x32xf32>, vector<2x8x32xf32> -> vector<2x8x32xf32>
    "tpu.trace_stop"() : () -> ()
    %98 = vector.shape_cast %97 : vector<2x8x32xf32> to vector<16x32xf32>
    %99 = vector.extract_strided_slice %8 {offsets = [0, 224], sizes = [32, 32], strides = [1, 1]} : vector<32x288xf32> to vector<32x32xf32>
    %cst_38 = arith.constant dense<0.000000e+00> : vector<16x32xf32>
    %100 = tpu.matmul %98, %99, %cst_38 {dimension_numbers = #tpu.dot_dimension_numbers<[1], [0], [0], [1], [0, 0, 1, 1], [], []>} : vector<16x32xf32>, vector<32x32xf32>, vector<16x32xf32> -> vector<16x32xf32>
    %101 = vector.extract_strided_slice %3 {offsets = [3, 0], sizes = [1, 32], strides = [1, 1]} : vector<25x96xf32> to vector<1x32xf32>
    %102 = vector.broadcast %101 : vector<1x32xf32> to vector<16x32xf32>
    %103 = arith.addf %100, %102 : vector<16x32xf32>
    %104 = arith.addf %67, %103 : vector<16x32xf32>
    %105 = vector.extract_strided_slice %3 {offsets = [7, 0], sizes = [1, 32], strides = [1, 1]} : vector<25x96xf32> to vector<1x32xf32>
    %106 = vector.extract_strided_slice %3 {offsets = [10, 0], sizes = [1, 32], strides = [1, 1]} : vector<25x96xf32> to vector<1x32xf32>
    %cst_39 = arith.constant dense<0.000000e+00> : vector<16xf32>
    %107 = vector.multi_reduction <add>, %104, %cst_39 [1] : vector<16x32xf32> to vector<16xf32>
    %108 = vector.shape_cast %107 : vector<16xf32> to vector<16x1xf32>
    %cst_40 = arith.constant 3.200000e+01 : f32
    %109 = vector.broadcast %cst_40 : f32 to vector<16x1xf32>
    %110 = arith.divf %108, %109 : vector<16x1xf32>
    %111 = vector.broadcast %110 : vector<16x1xf32> to vector<16x32xf32>
    %112 = arith.subf %104, %111 : vector<16x32xf32>
    %113 = arith.mulf %112, %112 : vector<16x32xf32>
    %cst_41 = arith.constant dense<0.000000e+00> : vector<16xf32>
    %114 = vector.multi_reduction <add>, %113, %cst_41 [1] : vector<16x32xf32> to vector<16xf32>
    %115 = vector.shape_cast %114 : vector<16xf32> to vector<16x1xf32>
    %cst_42 = arith.constant 3.200000e+01 : f32
    %116 = vector.broadcast %cst_42 : f32 to vector<16x1xf32>
    %117 = arith.divf %115, %116 : vector<16x1xf32>
    %118 = vector.broadcast %110 : vector<16x1xf32> to vector<16x32xf32>
    %119 = arith.subf %104, %118 : vector<16x32xf32>
    %cst_43 = arith.constant 9.99999974E-6 : f32
    %120 = vector.broadcast %cst_43 : f32 to vector<16x1xf32>
    %121 = arith.addf %117, %120 : vector<16x1xf32>
    %122 = math.rsqrt %121 : vector<16x1xf32>
    %123 = vector.broadcast %122 : vector<16x1xf32> to vector<16x32xf32>
    %124 = arith.mulf %119, %123 : vector<16x32xf32>
    %125 = vector.broadcast %105 : vector<1x32xf32> to vector<16x32xf32>
    %126 = arith.mulf %124, %125 : vector<16x32xf32>
    %127 = vector.broadcast %106 : vector<1x32xf32> to vector<16x32xf32>
    %128 = arith.addf %126, %127 : vector<16x32xf32>
    %129 = vector.extract_strided_slice %8 {offsets = [0, 256], sizes = [32, 32], strides = [1, 1]} : vector<32x288xf32> to vector<32x32xf32>
    %cst_44 = arith.constant dense<0.000000e+00> : vector<16x32xf32>
    %130 = tpu.matmul %128, %129, %cst_44 {dimension_numbers = #tpu.dot_dimension_numbers<[1], [0], [0], [1], [0, 0, 1, 1], [], []>} : vector<16x32xf32>, vector<32x32xf32>, vector<16x32xf32> -> vector<16x32xf32>
    %131 = vector.extract_strided_slice %3 {offsets = [4, 0], sizes = [1, 32], strides = [1, 1]} : vector<25x96xf32> to vector<1x32xf32>
    %132 = vector.broadcast %131 : vector<1x32xf32> to vector<16x32xf32>
    %133 = arith.addf %130, %132 : vector<16x32xf32>
    %cst_45 = arith.constant 0.000000e+00 : f32
    %134 = vector.broadcast %cst_45 : f32 to vector<16x32xf32>
    %135 = arith.maximumf %133, %134 : vector<16x32xf32>
    %cst_46 = arith.constant dense<0.000000e+00> : vector<16x32xf32>
    %136 = tpu.matmul %135, %10, %cst_46 {dimension_numbers = #tpu.dot_dimension_numbers<[1], [0], [0], [1], [0, 0, 1, 1], [], []>} : vector<16x32xf32>, vector<32x32xf32>, vector<16x32xf32> -> vector<16x32xf32>
    %137 = vector.extract_strided_slice %3 {offsets = [5, 0], sizes = [1, 32], strides = [1, 1]} : vector<25x96xf32> to vector<1x32xf32>
    %138 = vector.broadcast %137 : vector<1x32xf32> to vector<16x32xf32>
    %139 = arith.addf %136, %138 : vector<16x32xf32>
    %140 = arith.addf %128, %139 : vector<16x32xf32>
    %141 = vector.extract_strided_slice %3 {offsets = [8, 0], sizes = [1, 32], strides = [1, 1]} : vector<25x96xf32> to vector<1x32xf32>
    %142 = vector.extract_strided_slice %3 {offsets = [11, 0], sizes = [1, 32], strides = [1, 1]} : vector<25x96xf32> to vector<1x32xf32>
    %cst_47 = arith.constant dense<0.000000e+00> : vector<16xf32>
    %143 = vector.multi_reduction <add>, %140, %cst_47 [1] : vector<16x32xf32> to vector<16xf32>
    %144 = vector.shape_cast %143 : vector<16xf32> to vector<16x1xf32>
    %cst_48 = arith.constant 3.200000e+01 : f32
    %145 = vector.broadcast %cst_48 : f32 to vector<16x1xf32>
    %146 = arith.divf %144, %145 : vector<16x1xf32>
    %147 = vector.broadcast %146 : vector<16x1xf32> to vector<16x32xf32>
    %148 = arith.subf %140, %147 : vector<16x32xf32>
    %149 = arith.mulf %148, %148 : vector<16x32xf32>
    %cst_49 = arith.constant dense<0.000000e+00> : vector<16xf32>
    %150 = vector.multi_reduction <add>, %149, %cst_49 [1] : vector<16x32xf32> to vector<16xf32>
    %151 = vector.shape_cast %150 : vector<16xf32> to vector<16x1xf32>
    %cst_50 = arith.constant 3.200000e+01 : f32
    %152 = vector.broadcast %cst_50 : f32 to vector<16x1xf32>
    %153 = arith.divf %151, %152 : vector<16x1xf32>
    %154 = vector.broadcast %146 : vector<16x1xf32> to vector<16x32xf32>
    %155 = arith.subf %140, %154 : vector<16x32xf32>
    %cst_51 = arith.constant 9.99999974E-6 : f32
    %156 = vector.broadcast %cst_51 : f32 to vector<16x1xf32>
    %157 = arith.addf %153, %156 : vector<16x1xf32>
    %158 = math.rsqrt %157 : vector<16x1xf32>
    %159 = vector.broadcast %158 : vector<16x1xf32> to vector<16x32xf32>
    %160 = arith.mulf %155, %159 : vector<16x32xf32>
    %161 = vector.broadcast %141 : vector<1x32xf32> to vector<16x32xf32>
    %162 = arith.mulf %160, %161 : vector<16x32xf32>
    %163 = vector.broadcast %142 : vector<1x32xf32> to vector<16x32xf32>
    %164 = arith.addf %162, %163 : vector<16x32xf32>
    %c1 = arith.constant 1 : index
    %c0_52 = arith.constant 0 : index
    %c0_53 = arith.constant 0 : index
    %165 = vector.load %arg4[%c1, %c0_52, %c0_53] : memref<2x32x288xf32, #tpu.memory_space<vmem>>, vector<1x32x288xf32>
    %166 = vector.shape_cast %165 : vector<1x32x288xf32> to vector<32x288xf32>
    %c1_54 = arith.constant 1 : index
    %c0_55 = arith.constant 0 : index
    %c0_56 = arith.constant 0 : index
    %167 = vector.load %arg5[%c1_54, %c0_55, %c0_56] : memref<2x32x32xf32, #tpu.memory_space<vmem>>, vector<1x32x32xf32>
    %168 = vector.shape_cast %167 : vector<1x32x32xf32> to vector<32x32xf32>
    %169 = vector.extract_strided_slice %166 {offsets = [0, 0], sizes = [32, 96], strides = [1, 1]} : vector<32x288xf32> to vector<32x96xf32>
    %cst_57 = arith.constant dense<0.000000e+00> : vector<16x96xf32>
    %170 = tpu.matmul %164, %169, %cst_57 {dimension_numbers = #tpu.dot_dimension_numbers<[1], [0], [0], [1], [0, 0, 1, 1], [], []>} : vector<16x32xf32>, vector<32x96xf32>, vector<16x96xf32> -> vector<16x96xf32>
    %171 = vector.extract_strided_slice %3 {offsets = [12, 0], sizes = [1, 96], strides = [1, 1]} : vector<25x96xf32> to vector<1x96xf32>
    %172 = vector.broadcast %171 : vector<1x96xf32> to vector<16x96xf32>
    %173 = arith.addf %170, %172 : vector<16x96xf32>
    %174 = vector.extract_strided_slice %173 {offsets = [0, 0], sizes = [16, 32], strides = [1, 1]} : vector<16x96xf32> to vector<16x32xf32>
    %175 = vector.shape_cast %174 : vector<16x32xf32> to vector<2x8x32xf32>
    %176 = vector.extract_strided_slice %173 {offsets = [0, 32], sizes = [16, 32], strides = [1, 1]} : vector<16x96xf32> to vector<16x32xf32>
    %177 = vector.shape_cast %176 : vector<16x32xf32> to vector<2x8x32xf32>
    %178 = vector.extract_strided_slice %173 {offsets = [0, 64], sizes = [16, 32], strides = [1, 1]} : vector<16x96xf32> to vector<16x32xf32>
    %179 = vector.shape_cast %178 : vector<16x32xf32> to vector<2x8x32xf32>
    "tpu.trace_start"() <{level = 10 : i32, message = "bqd,bkd->bqk"}> : () -> ()
    %cst_58 = arith.constant dense<0.000000e+00> : vector<2x8x8xf32>
    %180 = tpu.matmul %175, %177, %cst_58 {dimension_numbers = #tpu.dot_dimension_numbers<[2], [2], [1], [1], [0, 0, 0, 1, 1, 1], [0], [0]>} : vector<2x8x32xf32>, vector<2x8x32xf32>, vector<2x8x8xf32> -> vector<2x8x8xf32>
    "tpu.trace_stop"() : () -> ()
    %cst_59 = arith.constant 0.176776692 : f32
    %181 = vector.broadcast %cst_59 : f32 to vector<2x8x8xf32>
    %182 = arith.mulf %180, %181 : vector<2x8x8xf32>
    %cst_60 = arith.constant dense<0xFF800000> : vector<2x8xf32>
    %183 = vector.multi_reduction <maximumf>, %182, %cst_60 [2] : vector<2x8x8xf32> to vector<2x8xf32>
    %cst_61 = arith.constant 0xFF800000 : f32
    %184 = vector.broadcast %cst_61 : f32 to vector<2x8xf32>
    %185 = arith.maximumf %184, %183 : vector<2x8xf32>
    %186 = vector.shape_cast %185 : vector<2x8xf32> to vector<2x8x1xf32>
    %187 = vector.broadcast %186 : vector<2x8x1xf32> to vector<2x8x8xf32>
    %188 = arith.subf %182, %187 : vector<2x8x8xf32>
    %189 = math.exp %188 : vector<2x8x8xf32>
    %cst_62 = arith.constant dense<0.000000e+00> : vector<2x8xf32>
    %190 = vector.multi_reduction <add>, %189, %cst_62 [2] : vector<2x8x8xf32> to vector<2x8xf32>
    %191 = vector.shape_cast %190 : vector<2x8xf32> to vector<2x8x1xf32>
    %192 = vector.broadcast %191 : vector<2x8x1xf32> to vector<2x8x8xf32>
    %193 = arith.divf %189, %192 : vector<2x8x8xf32>
    "tpu.trace_start"() <{level = 10 : i32, message = "bqk,bkd->bqd"}> : () -> ()
    %cst_63 = arith.constant dense<0.000000e+00> : vector<2x8x32xf32>
    %194 = tpu.matmul %193, %179, %cst_63 {dimension_numbers = #tpu.dot_dimension_numbers<[2], [1], [1], [2], [0, 0, 0, 1, 1, 2], [0], [0]>} : vector<2x8x8xf32>, vector<2x8x32xf32>, vector<2x8x32xf32> -> vector<2x8x32xf32>
    "tpu.trace_stop"() : () -> ()
    %195 = vector.shape_cast %194 : vector<2x8x32xf32> to vector<16x32xf32>
    %196 = vector.extract_strided_slice %166 {offsets = [0, 192], sizes = [32, 32], strides = [1, 1]} : vector<32x288xf32> to vector<32x32xf32>
    %cst_64 = arith.constant dense<0.000000e+00> : vector<16x32xf32>
    %197 = tpu.matmul %195, %196, %cst_64 {dimension_numbers = #tpu.dot_dimension_numbers<[1], [0], [0], [1], [0, 0, 1, 1], [], []>} : vector<16x32xf32>, vector<32x32xf32>, vector<16x32xf32> -> vector<16x32xf32>
    %198 = vector.extract_strided_slice %3 {offsets = [14, 0], sizes = [1, 32], strides = [1, 1]} : vector<25x96xf32> to vector<1x32xf32>
    %199 = vector.broadcast %198 : vector<1x32xf32> to vector<16x32xf32>
    %200 = arith.addf %197, %199 : vector<16x32xf32>
    %201 = arith.addf %164, %200 : vector<16x32xf32>
    %202 = vector.extract_strided_slice %3 {offsets = [18, 0], sizes = [1, 32], strides = [1, 1]} : vector<25x96xf32> to vector<1x32xf32>
    %203 = vector.extract_strided_slice %3 {offsets = [21, 0], sizes = [1, 32], strides = [1, 1]} : vector<25x96xf32> to vector<1x32xf32>
    %cst_65 = arith.constant dense<0.000000e+00> : vector<16xf32>
    %204 = vector.multi_reduction <add>, %201, %cst_65 [1] : vector<16x32xf32> to vector<16xf32>
    %205 = vector.shape_cast %204 : vector<16xf32> to vector<16x1xf32>
    %cst_66 = arith.constant 3.200000e+01 : f32
    %206 = vector.broadcast %cst_66 : f32 to vector<16x1xf32>
    %207 = arith.divf %205, %206 : vector<16x1xf32>
    %208 = vector.broadcast %207 : vector<16x1xf32> to vector<16x32xf32>
    %209 = arith.subf %201, %208 : vector<16x32xf32>
    %210 = arith.mulf %209, %209 : vector<16x32xf32>
    %cst_67 = arith.constant dense<0.000000e+00> : vector<16xf32>
    %211 = vector.multi_reduction <add>, %210, %cst_67 [1] : vector<16x32xf32> to vector<16xf32>
    %212 = vector.shape_cast %211 : vector<16xf32> to vector<16x1xf32>
    %cst_68 = arith.constant 3.200000e+01 : f32
    %213 = vector.broadcast %cst_68 : f32 to vector<16x1xf32>
    %214 = arith.divf %212, %213 : vector<16x1xf32>
    %215 = vector.broadcast %207 : vector<16x1xf32> to vector<16x32xf32>
    %216 = arith.subf %201, %215 : vector<16x32xf32>
    %cst_69 = arith.constant 9.99999974E-6 : f32
    %217 = vector.broadcast %cst_69 : f32 to vector<16x1xf32>
    %218 = arith.addf %214, %217 : vector<16x1xf32>
    %219 = math.rsqrt %218 : vector<16x1xf32>
    %220 = vector.broadcast %219 : vector<16x1xf32> to vector<16x32xf32>
    %221 = arith.mulf %216, %220 : vector<16x32xf32>
    %222 = vector.broadcast %202 : vector<1x32xf32> to vector<16x32xf32>
    %223 = arith.mulf %221, %222 : vector<16x32xf32>
    %224 = vector.broadcast %203 : vector<1x32xf32> to vector<16x32xf32>
    %225 = arith.addf %223, %224 : vector<16x32xf32>
    %226 = vector.extract_strided_slice %166 {offsets = [0, 96], sizes = [32, 32], strides = [1, 1]} : vector<32x288xf32> to vector<32x32xf32>
    %cst_70 = arith.constant dense<0.000000e+00> : vector<16x32xf32>
    %227 = tpu.matmul %225, %226, %cst_70 {dimension_numbers = #tpu.dot_dimension_numbers<[1], [0], [0], [1], [0, 0, 1, 1], [], []>} : vector<16x32xf32>, vector<32x32xf32>, vector<16x32xf32> -> vector<16x32xf32>
    %228 = vector.extract_strided_slice %3 {offsets = [13, 0], sizes = [1, 32], strides = [1, 1]} : vector<25x96xf32> to vector<1x32xf32>
    %229 = vector.broadcast %228 : vector<1x32xf32> to vector<16x32xf32>
    %230 = arith.addf %227, %229 : vector<16x32xf32>
    %231 = vector.extract_strided_slice %166 {offsets = [0, 128], sizes = [32, 64], strides = [1, 1]} : vector<32x288xf32> to vector<32x64xf32>
    %cst_71 = arith.constant dense<0.000000e+00> : vector<16x64xf32>
    %232 = tpu.matmul %6, %231, %cst_71 {dimension_numbers = #tpu.dot_dimension_numbers<[1], [0], [0], [1], [0, 0, 1, 1], [], []>} : vector<16x32xf32>, vector<32x64xf32>, vector<16x64xf32> -> vector<16x64xf32>
    %233 = vector.extract_strided_slice %3 {offsets = [13, 32], sizes = [1, 64], strides = [1, 1]} : vector<25x96xf32> to vector<1x64xf32>
    %234 = vector.broadcast %233 : vector<1x64xf32> to vector<16x64xf32>
    %235 = arith.addf %232, %234 : vector<16x64xf32>
    %236 = vector.shape_cast %230 : vector<16x32xf32> to vector<2x8x32xf32>
    %237 = vector.extract_strided_slice %235 {offsets = [0, 0], sizes = [16, 32], strides = [1, 1]} : vector<16x64xf32> to vector<16x32xf32>
    %238 = vector.shape_cast %237 : vector<16x32xf32> to vector<2x8x32xf32>
    %239 = vector.extract_strided_slice %235 {offsets = [0, 32], sizes = [16, 32], strides = [1, 1]} : vector<16x64xf32> to vector<16x32xf32>
    %240 = vector.shape_cast %239 : vector<16x32xf32> to vector<2x8x32xf32>
    "tpu.trace_start"() <{level = 10 : i32, message = "bqd,bkd->bqk"}> : () -> ()
    %cst_72 = arith.constant dense<0.000000e+00> : vector<2x8x8xf32>
    %241 = tpu.matmul %236, %238, %cst_72 {dimension_numbers = #tpu.dot_dimension_numbers<[2], [2], [1], [1], [0, 0, 0, 1, 1, 1], [0], [0]>} : vector<2x8x32xf32>, vector<2x8x32xf32>, vector<2x8x8xf32> -> vector<2x8x8xf32>
    "tpu.trace_stop"() : () -> ()
    %cst_73 = arith.constant 0.176776692 : f32
    %242 = vector.broadcast %cst_73 : f32 to vector<2x8x8xf32>
    %243 = arith.mulf %241, %242 : vector<2x8x8xf32>
    %cst_74 = arith.constant dense<0xFF800000> : vector<2x8xf32>
    %244 = vector.multi_reduction <maximumf>, %243, %cst_74 [2] : vector<2x8x8xf32> to vector<2x8xf32>
    %cst_75 = arith.constant 0xFF800000 : f32
    %245 = vector.broadcast %cst_75 : f32 to vector<2x8xf32>
    %246 = arith.maximumf %245, %244 : vector<2x8xf32>
    %247 = vector.shape_cast %246 : vector<2x8xf32> to vector<2x8x1xf32>
    %248 = vector.broadcast %247 : vector<2x8x1xf32> to vector<2x8x8xf32>
    %249 = arith.subf %243, %248 : vector<2x8x8xf32>
    %250 = math.exp %249 : vector<2x8x8xf32>
    %cst_76 = arith.constant dense<0.000000e+00> : vector<2x8xf32>
    %251 = vector.multi_reduction <add>, %250, %cst_76 [2] : vector<2x8x8xf32> to vector<2x8xf32>
    %252 = vector.shape_cast %251 : vector<2x8xf32> to vector<2x8x1xf32>
    %253 = vector.broadcast %252 : vector<2x8x1xf32> to vector<2x8x8xf32>
    %254 = arith.divf %250, %253 : vector<2x8x8xf32>
    "tpu.trace_start"() <{level = 10 : i32, message = "bqk,bkd->bqd"}> : () -> ()
    %cst_77 = arith.constant dense<0.000000e+00> : vector<2x8x32xf32>
    %255 = tpu.matmul %254, %240, %cst_77 {dimension_numbers = #tpu.dot_dimension_numbers<[2], [1], [1], [2], [0, 0, 0, 1, 1, 2], [0], [0]>} : vector<2x8x8xf32>, vector<2x8x32xf32>, vector<2x8x32xf32> -> vector<2x8x32xf32>
    "tpu.trace_stop"() : () -> ()
    %256 = vector.shape_cast %255 : vector<2x8x32xf32> to vector<16x32xf32>
    %257 = vector.extract_strided_slice %166 {offsets = [0, 224], sizes = [32, 32], strides = [1, 1]} : vector<32x288xf32> to vector<32x32xf32>
    %cst_78 = arith.constant dense<0.000000e+00> : vector<16x32xf32>
    %258 = tpu.matmul %256, %257, %cst_78 {dimension_numbers = #tpu.dot_dimension_numbers<[1], [0], [0], [1], [0, 0, 1, 1], [], []>} : vector<16x32xf32>, vector<32x32xf32>, vector<16x32xf32> -> vector<16x32xf32>
    %259 = vector.extract_strided_slice %3 {offsets = [15, 0], sizes = [1, 32], strides = [1, 1]} : vector<25x96xf32> to vector<1x32xf32>
    %260 = vector.broadcast %259 : vector<1x32xf32> to vector<16x32xf32>
    %261 = arith.addf %258, %260 : vector<16x32xf32>
    %262 = arith.addf %225, %261 : vector<16x32xf32>
    %263 = vector.extract_strided_slice %3 {offsets = [19, 0], sizes = [1, 32], strides = [1, 1]} : vector<25x96xf32> to vector<1x32xf32>
    %264 = vector.extract_strided_slice %3 {offsets = [22, 0], sizes = [1, 32], strides = [1, 1]} : vector<25x96xf32> to vector<1x32xf32>
    %cst_79 = arith.constant dense<0.000000e+00> : vector<16xf32>
    %265 = vector.multi_reduction <add>, %262, %cst_79 [1] : vector<16x32xf32> to vector<16xf32>
    %266 = vector.shape_cast %265 : vector<16xf32> to vector<16x1xf32>
    %cst_80 = arith.constant 3.200000e+01 : f32
    %267 = vector.broadcast %cst_80 : f32 to vector<16x1xf32>
    %268 = arith.divf %266, %267 : vector<16x1xf32>
    %269 = vector.broadcast %268 : vector<16x1xf32> to vector<16x32xf32>
    %270 = arith.subf %262, %269 : vector<16x32xf32>
    %271 = arith.mulf %270, %270 : vector<16x32xf32>
    %cst_81 = arith.constant dense<0.000000e+00> : vector<16xf32>
    %272 = vector.multi_reduction <add>, %271, %cst_81 [1] : vector<16x32xf32> to vector<16xf32>
    %273 = vector.shape_cast %272 : vector<16xf32> to vector<16x1xf32>
    %cst_82 = arith.constant 3.200000e+01 : f32
    %274 = vector.broadcast %cst_82 : f32 to vector<16x1xf32>
    %275 = arith.divf %273, %274 : vector<16x1xf32>
    %276 = vector.broadcast %268 : vector<16x1xf32> to vector<16x32xf32>
    %277 = arith.subf %262, %276 : vector<16x32xf32>
    %cst_83 = arith.constant 9.99999974E-6 : f32
    %278 = vector.broadcast %cst_83 : f32 to vector<16x1xf32>
    %279 = arith.addf %275, %278 : vector<16x1xf32>
    %280 = math.rsqrt %279 : vector<16x1xf32>
    %281 = vector.broadcast %280 : vector<16x1xf32> to vector<16x32xf32>
    %282 = arith.mulf %277, %281 : vector<16x32xf32>
    %283 = vector.broadcast %263 : vector<1x32xf32> to vector<16x32xf32>
    %284 = arith.mulf %282, %283 : vector<16x32xf32>
    %285 = vector.broadcast %264 : vector<1x32xf32> to vector<16x32xf32>
    %286 = arith.addf %284, %285 : vector<16x32xf32>
    %287 = vector.extract_strided_slice %166 {offsets = [0, 256], sizes = [32, 32], strides = [1, 1]} : vector<32x288xf32> to vector<32x32xf32>
    %cst_84 = arith.constant dense<0.000000e+00> : vector<16x32xf32>
    %288 = tpu.matmul %286, %287, %cst_84 {dimension_numbers = #tpu.dot_dimension_numbers<[1], [0], [0], [1], [0, 0, 1, 1], [], []>} : vector<16x32xf32>, vector<32x32xf32>, vector<16x32xf32> -> vector<16x32xf32>
    %289 = vector.extract_strided_slice %3 {offsets = [16, 0], sizes = [1, 32], strides = [1, 1]} : vector<25x96xf32> to vector<1x32xf32>
    %290 = vector.broadcast %289 : vector<1x32xf32> to vector<16x32xf32>
    %291 = arith.addf %288, %290 : vector<16x32xf32>
    %cst_85 = arith.constant 0.000000e+00 : f32
    %292 = vector.broadcast %cst_85 : f32 to vector<16x32xf32>
    %293 = arith.maximumf %291, %292 : vector<16x32xf32>
    %cst_86 = arith.constant dense<0.000000e+00> : vector<16x32xf32>
    %294 = tpu.matmul %293, %168, %cst_86 {dimension_numbers = #tpu.dot_dimension_numbers<[1], [0], [0], [1], [0, 0, 1, 1], [], []>} : vector<16x32xf32>, vector<32x32xf32>, vector<16x32xf32> -> vector<16x32xf32>
    %295 = vector.extract_strided_slice %3 {offsets = [17, 0], sizes = [1, 32], strides = [1, 1]} : vector<25x96xf32> to vector<1x32xf32>
    %296 = vector.broadcast %295 : vector<1x32xf32> to vector<16x32xf32>
    %297 = arith.addf %294, %296 : vector<16x32xf32>
    %298 = arith.addf %286, %297 : vector<16x32xf32>
    %299 = vector.extract_strided_slice %3 {offsets = [20, 0], sizes = [1, 32], strides = [1, 1]} : vector<25x96xf32> to vector<1x32xf32>
    %300 = vector.extract_strided_slice %3 {offsets = [23, 0], sizes = [1, 32], strides = [1, 1]} : vector<25x96xf32> to vector<1x32xf32>
    %cst_87 = arith.constant dense<0.000000e+00> : vector<16xf32>
    %301 = vector.multi_reduction <add>, %298, %cst_87 [1] : vector<16x32xf32> to vector<16xf32>
    %302 = vector.shape_cast %301 : vector<16xf32> to vector<16x1xf32>
    %cst_88 = arith.constant 3.200000e+01 : f32
    %303 = vector.broadcast %cst_88 : f32 to vector<16x1xf32>
    %304 = arith.divf %302, %303 : vector<16x1xf32>
    %305 = vector.broadcast %304 : vector<16x1xf32> to vector<16x32xf32>
    %306 = arith.subf %298, %305 : vector<16x32xf32>
    %307 = arith.mulf %306, %306 : vector<16x32xf32>
    %cst_89 = arith.constant dense<0.000000e+00> : vector<16xf32>
    %308 = vector.multi_reduction <add>, %307, %cst_89 [1] : vector<16x32xf32> to vector<16xf32>
    %309 = vector.shape_cast %308 : vector<16xf32> to vector<16x1xf32>
    %cst_90 = arith.constant 3.200000e+01 : f32
    %310 = vector.broadcast %cst_90 : f32 to vector<16x1xf32>
    %311 = arith.divf %309, %310 : vector<16x1xf32>
    %312 = vector.broadcast %304 : vector<16x1xf32> to vector<16x32xf32>
    %313 = arith.subf %298, %312 : vector<16x32xf32>
    %cst_91 = arith.constant 9.99999974E-6 : f32
    %314 = vector.broadcast %cst_91 : f32 to vector<16x1xf32>
    %315 = arith.addf %311, %314 : vector<16x1xf32>
    %316 = math.rsqrt %315 : vector<16x1xf32>
    %317 = vector.broadcast %316 : vector<16x1xf32> to vector<16x32xf32>
    %318 = arith.mulf %313, %317 : vector<16x32xf32>
    %319 = vector.broadcast %299 : vector<1x32xf32> to vector<16x32xf32>
    %320 = arith.mulf %318, %319 : vector<16x32xf32>
    %321 = vector.broadcast %300 : vector<1x32xf32> to vector<16x32xf32>
    %322 = arith.addf %320, %321 : vector<16x32xf32>
    %cst_92 = arith.constant dense<0.000000e+00> : vector<16x2xf32>
    %323 = tpu.matmul %322, %4, %cst_92 {dimension_numbers = #tpu.dot_dimension_numbers<[1], [0], [0], [1], [0, 0, 1, 1], [], []>} : vector<16x32xf32>, vector<32x2xf32>, vector<16x2xf32> -> vector<16x2xf32>
    %324 = vector.extract_strided_slice %3 {offsets = [24, 0], sizes = [1, 2], strides = [1, 1]} : vector<25x96xf32> to vector<1x2xf32>
    %325 = vector.broadcast %324 : vector<1x2xf32> to vector<16x2xf32>
    %326 = arith.addf %323, %325 : vector<16x2xf32>
    %327 = vector.extract_strided_slice %326 {offsets = [0, 1], sizes = [16, 1], strides = [1, 1]} : vector<16x2xf32> to vector<16x1xf32>
    %328 = vector.extract_strided_slice %326 {offsets = [0, 0], sizes = [16, 1], strides = [1, 1]} : vector<16x2xf32> to vector<16x1xf32>
    %329 = arith.subf %327, %328 : vector<16x1xf32>
    %330 = vector.shape_cast %329 : vector<16x1xf32> to vector<2x8x1xf32>
    %331 = arith.negf %330 : vector<2x8x1xf32>
    %332 = math.exp %331 : vector<2x8x1xf32>
    %cst_93 = arith.constant 1.000000e+00 : f32
    %333 = vector.broadcast %cst_93 : f32 to vector<2x8x1xf32>
    %334 = arith.addf %333, %332 : vector<2x8x1xf32>
    %335 = arith.divf %333, %334 : vector<2x8x1xf32>
    %336 = vector.extract_strided_slice %2 {offsets = [0, 0, 0], sizes = [2, 8, 1], strides = [1, 1, 1]} : vector<2x8x2xf32> to vector<2x8x1xf32>
    %337 = vector.extract_strided_slice %2 {offsets = [0, 0, 1], sizes = [2, 8, 1], strides = [1, 1, 1]} : vector<2x8x2xf32> to vector<2x8x1xf32>
    %338 = arith.subf %336, %337 : vector<2x8x1xf32>
    %339 = arith.cmpf ogt, %330, %338 : vector<2x8x1xf32>
    %340 = arith.extui %339 : vector<2x8x1xi1> to vector<2x8x1xi32>
    %341 = arith.sitofp %340 : vector<2x8x1xi32> to vector<2x8x1xf32>
    %342 = tpu.concatenate %335, %341 in 2 : vector<2x8x1xf32>, vector<2x8x1xf32> -> vector<2x8x2xf32>
    %c0_94 = arith.constant 0 : index
    %c0_95 = arith.constant 0 : index
    %c0_96 = arith.constant 0 : index
    %343 = vector.load %arg8[%c0_94, %c0_95, %c0_96] : memref<2x8x2xf32, #tpu.memory_space<vmem>>, vector<2x8x2xf32>
    tpu.vector_store %arg8[%c0_94, %c0_95, %c0_96], %342 {strides = array<i32>} : memref<2x8x2xf32, #tpu.memory_space<vmem>>, vector<2x8x2xf32>,
    return
  }
  func.func @transform_0(%arg0: i32) -> (i32, i32, i32) {
    %c0_i32 = arith.constant 0 : i32
    %c0_i32_0 = arith.constant 0 : i32
    %c0_i32_1 = arith.constant 0 : i32
    %c0_i32_2 = arith.constant 0 : i32
    return %c0_i32, %c0_i32_0, %c0_i32_1 : i32, i32, i32
  }
  func.func @transform_1(%arg0: i32) -> (i32, i32, i32) {
    %c0_i32 = arith.constant 0 : i32
    %c0_i32_0 = arith.constant 0 : i32
    %c0_i32_1 = arith.constant 0 : i32
    %c0_i32_2 = arith.constant 0 : i32
    return %c0_i32, %c0_i32_0, %c0_i32_1 : i32, i32, i32
  }
  func.func @transform_2(%arg0: i32) -> (i32, i32, i32) {
    %c0_i32 = arith.constant 0 : i32
    %c0_i32_0 = arith.constant 0 : i32
    %c0_i32_1 = arith.constant 0 : i32
    %c0_i32_2 = arith.constant 0 : i32
    return %c0_i32, %c0_i32_0, %c0_i32_1 : i32, i32, i32
  }
  func.func @transform_3(%arg0: i32) -> (i32, i32, i32) {
    %c0_i32 = arith.constant 0 : i32
    %c0_i32_0 = arith.constant 0 : i32
    %c0_i32_1 = arith.constant 0 : i32
    %c0_i32_2 = arith.constant 0 : i32
    return %c0_i32, %c0_i32_0, %c0_i32_1 : i32, i32, i32
  }
  func.func @transform_4(%arg0: i32) -> (i32, i32, i32) {
    %c0_i32 = arith.constant 0 : i32
    %c0_i32_0 = arith.constant 0 : i32
    %c0_i32_1 = arith.constant 0 : i32
    %c0_i32_2 = arith.constant 0 : i32
    return %c0_i32, %c0_i32_0, %c0_i32_1 : i32, i32, i32
  }
  func.func @transform_5(%arg0: i32) -> (i32, i32) {
    %c0_i32 = arith.constant 0 : i32
    %c0_i32_0 = arith.constant 0 : i32
    %c0_i32_1 = arith.constant 0 : i32
    return %c0_i32, %c0_i32_0 : i32, i32
  }
  func.func @transform_6(%arg0: i32) -> (i32, i32) {
    %c0_i32 = arith.constant 0 : i32
    %c0_i32_0 = arith.constant 0 : i32
    %c0_i32_1 = arith.constant 0 : i32
    return %c0_i32, %c0_i32_0 : i32, i32
  }
  func.func @transform_7(%arg0: i32) -> (i32, i32, i32) {
    %c0_i32 = arith.constant 0 : i32
    %c0_i32_0 = arith.constant 0 : i32
    %c0_i32_1 = arith.constant 0 : i32
    %c0_i32_2 = arith.constant 0 : i32
    return %c0_i32, %c0_i32_0, %c0_i32_1 : i32, i32, i32
  }
}

</mosaic_0001>

<llo_original>
// kernel: tpu_custom_call.1
$region0: #{tpu_custom_call.1}
  #allocation0 [shape = 'u32[]', space=smem, size = 0x4, offset = 0x4, fixed_abs, tag = 'smem constant byte address 0x4 - core index']
  #allocation1 [shape = 'u32[72,128]{1,0:T(1,128)}', space=vmem, size = 0x9000, scoped, tag = 'internal scratch']
  %s0 = inlined_call_operand.vmem [shape: f32[2,8,32], index: 0, kind: input, shape index: {}]
  %s1 = inlined_call_operand.hbm [shape: f32[2,8,32], index: 1, kind: input, shape index: {}]
  %s2 = inlined_call_operand.vmem [shape: f32[2,8,2], index: 2, kind: input, shape index: {}]
  %s3 = inlined_call_operand.hbm [shape: f32[2,32,288], index: 3, kind: input, shape index: {}]
  %s4 = inlined_call_operand.hbm [shape: f32[2,32,32], index: 4, kind: input, shape index: {}]
  %s5 = inlined_call_operand.vmem [shape: f32[32,2], index: 5, kind: input, shape index: {}]
  %s6 = inlined_call_operand.vmem [shape: f32[25,96], index: 6, kind: input, shape index: {}]
  %s7 = inlined_call_operand.vmem [shape: f32[2,8,2], index: 7, kind: output, shape index: {}]
  %s8 = sld [smem:[#allocation0]]
  $region50: #{tpu_custom_call.1} parent=0
    _
  %s10 = ssub.s32 1, %s8
  %s11 = scalar_select 0, %s10, %s8
  $region1: #{tpu_custom_call.1} parent=0
    #allocation2 [shape = 'u8[8192]{0}', space=vmem, size = 0x2000, scoped, tag = 'input window, operand 1, single buffered']
    #allocation3 [shape = 's32[1]{0}', space=sflag, size = 0x4, scoped, tag = 'scoped memory for tpu_custom_call.1']
    #allocation4 [shape = 'u8[98304]{0}', space=vmem, size = 0x18000, scoped, tag = 'input window, operand 3, single buffered']
    #allocation5 [shape = 's32[1]{0}', space=sflag, size = 0x4, scoped, tag = 'scoped memory for tpu_custom_call.1']
    #allocation6 [shape = 'u8[32768]{0}', space=vmem, size = 0x8000, scoped, tag = 'input window, operand 4, single buffered']
    %12 = vsyncpa [#allocation3], 0
    %13 = vsyncpa [#allocation5], 0
    // Predicated region
    $region2: #{tpu_custom_call.1} parent=1 // pred_check
      _
    $region3: #{tpu_custom_call.1} parent=1 // pred_check_branch
      %15 = sbr.rel (0) target = $region5
    $region4: #{tpu_custom_call.1} parent=1 // pred_region
      _
    $region5: #{tpu_custom_call.1} parent=1 // pred_fallthru
      _
    // Predicated region
    $region6: #{tpu_custom_call.1} parent=1 // pred_check
      _
    $region7: #{tpu_custom_call.1} parent=1 // pred_check_branch
      %17 = sbr.rel (0) target = $region9
    $region8: #{tpu_custom_call.1} parent=1 // pred_region
      %19 = vsyncadd [#allocation3], 0
      %s20 = sshll.u32 %s1, 4
      %s21 = int_to_ptr.hbm [resolvable:$true] %s20
      %s22 = sshll.u32 [#allocation2], 4
      %s23 = int_to_ptr.vmem [resolvable:$true] %s22
      %28 = dma.hbm_to_vmem [thread:$0]  %s21, 256, %s23, [#allocation3], 128, 128, 8
    $region9: #{tpu_custom_call.1} parent=1 // pred_fallthru
      _
    // Predicated region
    $region10: #{tpu_custom_call.1} parent=1 // pred_check
      _
    $region11: #{tpu_custom_call.1} parent=1 // pred_check_branch
      %30 = sbr.rel (0) target = $region13
    $region12: #{tpu_custom_call.1} parent=1 // pred_region
      _
    $region13: #{tpu_custom_call.1} parent=1 // pred_fallthru
      _
    // Predicated region
    $region14: #{tpu_custom_call.1} parent=1 // pred_check
      _
    $region15: #{tpu_custom_call.1} parent=1 // pred_check_branch
      %32 = sbr.rel (0) target = $region17
    $region16: #{tpu_custom_call.1} parent=1 // pred_region
      %34 = vsyncadd [#allocation5], 0
      %s35 = sshll.u32 %s3, 4
      %s36 = int_to_ptr.hbm [resolvable:$true] %s35
      %s37 = sshll.u32 [#allocation4], 4
      %s38 = int_to_ptr.vmem [resolvable:$true] %s37
      %43 = dma.hbm_to_vmem [thread:$0]  %s36, 3072, %s38, [#allocation5], 384, 384, 24
    $region17: #{tpu_custom_call.1} parent=1 // pred_fallthru
      _
    // Predicated region
    $region18: #{tpu_custom_call.1} parent=1 // pred_check
      _
    $region19: #{tpu_custom_call.1} parent=1 // pred_check_branch
      %45 = sbr.rel (0) target = $region21
    $region20: #{tpu_custom_call.1} parent=1 // pred_region
      %47 = vsyncadd [#allocation5], 0
      %s48 = sshll.u32 %s4, 4
      %s49 = int_to_ptr.hbm [resolvable:$true] %s48
      %s50 = sshll.u32 [#allocation6], 4
      %s51 = int_to_ptr.vmem [resolvable:$true] %s50
      %56 = dma.hbm_to_vmem [thread:$0]  %s49, 1024, %s51, [#allocation5], 128, 128, 8
    $region21: #{tpu_custom_call.1} parent=1 // pred_fallthru
      _
    // Predicated region
    $region22: #{tpu_custom_call.1} parent=1 // pred_check
      _
    $region23: #{tpu_custom_call.1} parent=1 // pred_check_branch
      %58 = sbr.rel (0) target = $region25
    $region24: #{tpu_custom_call.1} parent=1 // pred_region
      _
    $region25: #{tpu_custom_call.1} parent=1 // pred_fallthru
      _
    // Predicated region
    $region26: #{tpu_custom_call.1} parent=1 // pred_check
      _
    $region27: #{tpu_custom_call.1} parent=1 // pred_check_branch
      %60 = sbr.rel (0) target = $region29
    $region28: #{tpu_custom_call.1} parent=1 // pred_region
      _
    $region29: #{tpu_custom_call.1} parent=1 // pred_fallthru
      _
    // Predicated region
    $region30: #{tpu_custom_call.1} parent=1 // pred_check
      _
    $region31: #{tpu_custom_call.1} parent=1 // pred_check_branch
      %62 = sbr.rel (0) target = $region33
    $region32: #{tpu_custom_call.1} parent=1 // pred_region
      %64 = dma.done [#allocation3], 256
    $region33: #{tpu_custom_call.1} parent=1 // pred_fallthru
      _
    // Predicated region
    $region34: #{tpu_custom_call.1} parent=1 // pred_check
      _
    $region35: #{tpu_custom_call.1} parent=1 // pred_check_branch
      %66 = sbr.rel (0) target = $region37
    $region36: #{tpu_custom_call.1} parent=1 // pred_region
      %68 = dma.done [#allocation5], 3072
    $region37: #{tpu_custom_call.1} parent=1 // pred_fallthru
      _
    // Predicated region
    $region38: #{tpu_custom_call.1} parent=1 // pred_check
      _
    $region39: #{tpu_custom_call.1} parent=1 // pred_check_branch
      %70 = sbr.rel (0) target = $region41
    $region40: #{tpu_custom_call.1} parent=1 // pred_region
      %72 = dma.done [#allocation5], 1024
    $region41: #{tpu_custom_call.1} parent=1 // pred_fallthru
      _
    %v73 = vld [vmem:[%s0] sm:$0xff]
    %v74 = vld [vmem:[%s0 + $0x8] sm:$0xff]
    %v75 = vld [vmem:[#allocation2] sm:$0xff]
    %v76 = vld [vmem:[#allocation2 + $0x8] sm:$0xff]
    %v77 = vld [vmem:[%s2] sm:$0xff]
    %v78 = vld [vmem:[%s2 + $0x8] sm:$0xff]
    %v79 = vld [vmem:[%s6] sm:$0xff]
    %v80 = vld [vmem:[%s6 + $0x8] sm:$0xff]
    %v81 = vld [vmem:[%s6 + $0x10] sm:$0xff]
    %v82 = vld [vmem:[%s6 + $0x18] sm:$0x1]
    %v83 = vld [vmem:[%s5] sm:$0xff]
    %v84 = vld [vmem:[%s5 + $0x8] sm:$0xff]
    %v85 = vld [vmem:[%s5 + $0x10] sm:$0xff]
    %v86 = vld [vmem:[%s5 + $0x18] sm:$0xff]
    %v87 = vld [vmem:[#allocation4] sm:$0xff]
    %v88 = vld [vmem:[#allocation4 + $0x8] sm:$0xff]
    %v89 = vld [vmem:[#allocation4 + $0x10] sm:$0xff]
    %v90 = vld [vmem:[#allocation4 + $0x18] sm:$0xff]
    %v91 = vld [vmem:[#allocation4 + $0x20] sm:$0xff]
    %v92 = vld [vmem:[#allocation4 + $0x28] sm:$0xff]
    %v93 = vld [vmem:[#allocation4 + $0x30] sm:$0xff]
    %v94 = vld [vmem:[#allocation4 + $0x38] sm:$0xff]
    %v95 = vld [vmem:[#allocation4 + $0x40] sm:$0xff]
    %v96 = vld [vmem:[#allocation4 + $0x48] sm:$0xff]
    %v97 = vld [vmem:[#allocation4 + $0x50] sm:$0xff]
    %v98 = vld [vmem:[#allocation4 + $0x58] sm:$0xff]
    %v99 = vld [vmem:[#allocation6] sm:$0xff]
    %v100 = vld [vmem:[#allocation6 + $0x8] sm:$0xff]
    %v101 = vld [vmem:[#allocation6 + $0x10] sm:$0xff]
    %v102 = vld [vmem:[#allocation6 + $0x18] sm:$0xff]
    %v103 = vperm.slane %v79, 0
    %vm104 = vcmask 261120
    %v106 = vsel %vm104, %v73, 0
    %v109 = vsel %vm104, %v74, 0
    %111 = vmatpush.msra.mxu0 0.0
    %112 = vmatpush.msra.mxu0 0.0
    %113 = vmatpush.msra.mxu0 0.0
    %114 = vmatpush.msra.mxu0 0.0
    %115 = vmatpush.msra.mxu0 0.0
    %116 = vmatpush.msra.mxu0 0.0
    %117 = vmatpush.msra.mxu0 0.0
    %118 = vmatpush.msra.mxu0 0.0
    %119 = vmatpush.msra.mxu0 0.0
    %120 = vmatpush.msra.mxu0 0.0
    %121 = vmatpush.msra.mxu0 0.0
    %122 = vmatpush.msra.mxu0 0.0
    %123 = vmatpush.msra.mxu0 %v96
    %124 = vmatpush.msra.mxu0 %v93
    %125 = vmatpush.msra.mxu0 %v90
    %126 = vmatpush.msra.mxu0 %v87
    %127 = vmatmul.f32.gmra.mxu0 %v106
    %v128 = vpop.f32.mrf.mxu0
    %v129 = vadd.f32 %v103, %v128
    %130 = vmatmul.f32.gmra.mxu0 %v109
    %v131 = vpop.f32.mrf.mxu0
    %v132 = vadd.f32 %v103, %v131
    %133 = vdwg.mxu0
    %135 = vrot.lane.b32.xlu0 %v129, 96
    %v136 = vpop.permute.xlu0 %135
    %v137 = vsel %vm104, %v129, 0
    %v139 = vsel %vm104, %v136, 0
    %141 = vmatpush.xpose.msra.mxu0 0.0
    %142 = vmatpush.xpose.msra.mxu0 0.0
    %143 = vmatpush.xpose.msra.mxu0 0.0
    %144 = vmatpush.xpose.msra.mxu0 0.0
    %145 = vmatpush.xpose.msra.mxu0 0.0
    %146 = vmatpush.xpose.msra.mxu0 0.0
    %147 = vmatpush.xpose.msra.mxu0 0.0
    %148 = vmatpush.xpose.msra.mxu0 0.0
    %149 = vmatpush.xpose.msra.mxu0 0.0
    %150 = vmatpush.xpose.msra.mxu0 0.0
    %151 = vmatpush.xpose.msra.mxu0 0.0
    %152 = vmatpush.xpose.msra.mxu0 0.0
    %153 = vmatpush.xpose.msra.mxu0 0.0
    %154 = vmatpush.xpose.msra.mxu0 0.0
    %155 = vmatpush.xpose.msra.mxu0 0.0
    %156 = vmatpush.xpose.msra.mxu0 %v139
    %157 = vmatmul.f32.gmra.mxu0 %v137
    %v158 = vpop.f32.mrf.mxu0
    %v159 = vadd.f32 0.0, %v158
    %160 = vdwg.mxu0
    %162 = vrot.lane.b32.xlu0 %v132, 96
    %v163 = vpop.permute.xlu0 %162
    %v164 = vsel %vm104, %v132, 0
    %v166 = vsel %vm104, %v163, 0
    %168 = vmatpush.xpose.msra.mxu0 0.0
    %169 = vmatpush.xpose.msra.mxu0 0.0
    %170 = vmatpush.xpose.msra.mxu0 0.0
    %171 = vmatpush.xpose.msra.mxu0 0.0
    %172 = vmatpush.xpose.msra.mxu0 0.0
    %173 = vmatpush.xpose.msra.mxu0 0.0
    %174 = vmatpush.xpose.msra.mxu0 0.0
    %175 = vmatpush.xpose.msra.mxu0 0.0
    %176 = vmatpush.xpose.msra.mxu0 0.0
    %177 = vmatpush.xpose.msra.mxu0 0.0
    %178 = vmatpush.xpose.msra.mxu0 0.0
    %179 = vmatpush.xpose.msra.mxu0 0.0
    %180 = vmatpush.xpose.msra.mxu0 0.0
    %181 = vmatpush.xpose.msra.mxu0 0.0
    %182 = vmatpush.xpose.msra.mxu0 0.0
    %183 = vmatpush.xpose.msra.mxu0 %v166
    %184 = vmatmul.f32.gmra.mxu0 %v164
    %v185 = vpop.f32.mrf.mxu0
    %v186 = vadd.f32 0.0, %v185
    %187 = vdwg.mxu0
    %v188 = vmul.f32 %v159, 0.17677669
    %v189 = vmul.f32 %v186, 0.17677669
    %vm190 = vcmask 64512
    %v191 = vsel %vm190, %v188, -inf
    %192 = vmax.xlane.f32.xlu0 %v191
    %v193 = vpop.xlane.xlu0 %192
    %v194 = vsel %vm190, %v189, -inf
    %195 = vmax.xlane.f32.xlu0 %v194
    %v196 = vpop.xlane.xlu0 %195
    %v197 = vsub.f32 %v188, %v193
    %v198 = vsub.f32 %v189, %v196
    %v199 = vmul.f32 %v197, 1.442695
    %v200 = vpow.pop %v199
    %v201 = vmul.f32 %v198, 1.442695
    %v202 = vpow.pop %v201
    %v203 = vsel %vm190, %v200, 0.0
    %204 = vadd.xlane.f32.xlu0 %v203
    %v205 = vpop.xlane.xlu0 %204
    %v206 = vsel %vm190, %v202, 0.0
    %207 = vadd.xlane.f32.xlu0 %v206
    %v208 = vpop.xlane.xlu0 %207
    %v209 = vrcp.pop %v205
    %v210 = vmul.f32 %v205, %v209
    %v211 = vsub.f32 1.0, %v210
    %v212 = vmul.f32 %v209, %v211
    %v213 = vadd.f32 %v209, %v212
    %vm214 = vweird.f32 %v205
    %vm215 = vweird.f32 %v209
    %vm216 = vmor %vm214, %vm215
    %v217 = vsel %vm216, %v209, %v213
    %v218 = vand.u32 2147483647, %v205
    %vm219 = vcmp.eq.f32.partialorder %v218, 8.507059e+37
    %v220 = vand.u32 %v205, 2147483648
    %v221 = vor.u32 1.1754944e-38, %v220
    %v222 = vsel %vm219, %v221, %v217
    %v223 = vmul.f32 %v200, %v222
    %v224 = vrcp.pop %v208
    %v225 = vmul.f32 %v208, %v224
    %v226 = vsub.f32 1.0, %v225
    %v227 = vmul.f32 %v224, %v226
    %v228 = vadd.f32 %v224, %v227
    %vm229 = vweird.f32 %v208
    %vm230 = vweird.f32 %v224
    %vm231 = vmor %vm229, %vm230
    %v232 = vsel %vm231, %v224, %v228
    %v233 = vand.u32 2147483647, %v208
    %vm234 = vcmp.eq.f32.partialorder %v233, 8.507059e+37
    %v235 = vand.u32 %v208, 2147483648
    %v236 = vor.u32 1.1754944e-38, %v235
    %v237 = vsel %vm234, %v236, %v232
    %v238 = vmul.f32 %v202, %v237
    %239 = vrot.lane.b32.xlu0 %v129, 64
    %v240 = vpop.permute.xlu0 %239
    %v243 = vsel %vm190, %v223, 0
    %245 = vmatpush.msra.mxu0 0.0
    %246 = vmatpush.msra.mxu0 0.0
    %247 = vmatpush.msra.mxu0 0.0
    %248 = vmatpush.msra.mxu0 0.0
    %249 = vmatpush.msra.mxu0 0.0
    %250 = vmatpush.msra.mxu0 0.0
    %251 = vmatpush.msra.mxu0 0.0
    %252 = vmatpush.msra.mxu0 0.0
    %253 = vmatpush.msra.mxu0 0.0
    %254 = vmatpush.msra.mxu0 0.0
    %255 = vmatpush.msra.mxu0 0.0
    %256 = vmatpush.msra.mxu0 0.0
    %257 = vmatpush.msra.mxu0 0.0
    %258 = vmatpush.msra.mxu0 0.0
    %259 = vmatpush.msra.mxu0 0.0
    %260 = vmatpush.msra.mxu0 %v240
    %261 = vmatmul.f32.gmra.mxu0 %v243
    %v262 = vpop.f32.mrf.mxu0
    %v263 = vadd.f32 0.0, %v262
    %264 = vdwg.mxu0
    %265 = vrot.lane.b32.xlu0 %v132, 64
    %v266 = vpop.permute.xlu0 %265
    %v269 = vsel %vm190, %v238, 0
    %271 = vmatpush.msra.mxu0 0.0
    %272 = vmatpush.msra.mxu0 0.0
    %273 = vmatpush.msra.mxu0 0.0
    %274 = vmatpush.msra.mxu0 0.0
    %275 = vmatpush.msra.mxu0 0.0
    %276 = vmatpush.msra.mxu0 0.0
    %277 = vmatpush.msra.mxu0 0.0
    %278 = vmatpush.msra.mxu0 0.0
    %279 = vmatpush.msra.mxu0 0.0
    %280 = vmatpush.msra.mxu0 0.0
    %281 = vmatpush.msra.mxu0 0.0
    %282 = vmatpush.msra.mxu0 0.0
    %283 = vmatpush.msra.mxu0 0.0
    %284 = vmatpush.msra.mxu0 0.0
    %285 = vmatpush.msra.mxu0 0.0
    %286 = vmatpush.msra.mxu0 %v266
    %287 = vmatmul.f32.gmra.mxu0 %v269
    %v288 = vpop.f32.mrf.mxu0
    %v289 = vadd.f32 0.0, %v288
    %290 = vdwg.mxu0
    %v291 = vperm.slane %v79, 2
    %296 = vrot.lane.b32.xlu0 %v88, 64
    %v297 = vpop.permute.xlu0 %296
    %298 = vrot.lane.b32.xlu0 %v91, 64
    %v299 = vpop.permute.xlu0 %298
    %300 = vrot.lane.b32.xlu0 %v94, 64
    %v301 = vpop.permute.xlu0 %300
    %302 = vrot.lane.b32.xlu0 %v97, 64
    %v303 = vpop.permute.xlu0 %302
    %v309 = vsel %vm104, %v263, 0
    %v312 = vsel %vm104, %v289, 0
    %314 = vmatpush.msra.mxu0 0.0
    %315 = vmatpush.msra.mxu0 0.0
    %316 = vmatpush.msra.mxu0 0.0
    %317 = vmatpush.msra.mxu0 0.0
    %318 = vmatpush.msra.mxu0 0.0
    %319 = vmatpush.msra.mxu0 0.0
    %320 = vmatpush.msra.mxu0 0.0
    %321 = vmatpush.msra.mxu0 0.0
    %322 = vmatpush.msra.mxu0 0.0
    %323 = vmatpush.msra.mxu0 0.0
    %324 = vmatpush.msra.mxu0 0.0
    %325 = vmatpush.msra.mxu0 0.0
    %326 = vmatpush.msra.mxu0 %v303
    %327 = vmatpush.msra.mxu0 %v301
    %328 = vmatpush.msra.mxu0 %v299
    %329 = vmatpush.msra.mxu0 %v297
    %330 = vmatmul.f32.gmra.mxu0 %v309
    %v331 = vpop.f32.mrf.mxu0
    %v332 = vadd.f32 %v291, %v331
    %333 = vmatmul.f32.gmra.mxu0 %v312
    %v334 = vpop.f32.mrf.mxu0
    %v335 = vadd.f32 %v291, %v334
    %336 = vdwg.mxu0
    %v337 = vadd.f32 %v73, %v332
    %v338 = vadd.f32 %v74, %v335
    %v339 = vsel %vm104, %v337, 0.0
    %340 = vadd.xlane.f32.xlu0 %v339
    %v341 = vpop.xlane.xlu0 %340
    %v342 = vsel %vm104, %v338, 0.0
    %343 = vadd.xlane.f32.xlu0 %v342
    %v344 = vpop.xlane.xlu0 %343
    %v345 = vrcp.pop 32.0
    %v346 = vmul.f32 32.0, %v345
    %v347 = vsub.f32 1.0, %v346
    %v348 = vmul.f32 %v345, %v347
    %v349 = vadd.f32 %v345, %v348
    %vm350 = vweird.f32 %v345
    %v351 = vsel %vm350, %v345, %v349
    %v352 = vmul.f32 %v341, %v351
    %v353 = vmul.f32 %v344, %v351
    %v354 = vsub.f32 %v337, %v352
    %v355 = vsub.f32 %v338, %v353
    %v356 = vmul.f32 %v354, %v354
    %v357 = vmul.f32 %v355, %v355
    %v358 = vsel %vm104, %v356, 0.0
    %359 = vadd.xlane.f32.xlu0 %v358
    %v360 = vpop.xlane.xlu0 %359
    %v361 = vsel %vm104, %v357, 0.0
    %362 = vadd.xlane.f32.xlu0 %v361
    %v363 = vpop.xlane.xlu0 %362
    %v364 = vmul.f32 %v360, %v351
    %v365 = vmul.f32 %v363, %v351
    %v366 = vadd.f32 %v364, 1e-05
    %v367 = vadd.f32 %v365, 1e-05
    %v368 = vrsqrt.pop %v366
    %v369 = vmul.f32 %v368, %v366
    %v370 = vmul.f32 %v369, %v368
    %v371 = vmul.f32 0.5, %v370
    %v372 = vsub.f32 1.5, %v371
    %v373 = vmul.f32 %v368, %v372
    %vm374 = vweird.f32 %v366
    %vm375 = vweird.f32 %v368
    %vm376 = vmor %vm374, %vm375
    %v377 = vsel %vm376, %v368, %v373
    %v378 = vrsqrt.pop %v367
    %v379 = vmul.f32 %v378, %v367
    %v380 = vmul.f32 %v379, %v378
    %v381 = vmul.f32 0.5, %v380
    %v382 = vsub.f32 1.5, %v381
    %v383 = vmul.f32 %v378, %v382
    %vm384 = vweird.f32 %v367
    %vm385 = vweird.f32 %v378
    %vm386 = vmor %vm384, %vm385
    %v387 = vsel %vm386, %v378, %v383
    %v388 = vmul.f32 %v354, %v377
    %v389 = vmul.f32 %v355, %v387
    %v390 = vperm.slane %v79, 6
    %v391 = vmul.f32 %v388, %v390
    %v392 = vmul.f32 %v389, %v390
    %v393 = vperm.slane %v80, 1
    %v394 = vadd.f32 %v391, %v393
    %v395 = vadd.f32 %v392, %v393
    %v396 = vperm.slane %v79, 1
    %401 = vrot.lane.b32.xlu0 %v87, 32
    %v402 = vpop.permute.xlu0 %401
    %403 = vrot.lane.b32.xlu0 %v90, 32
    %v404 = vpop.permute.xlu0 %403
    %405 = vrot.lane.b32.xlu0 %v93, 32
    %v406 = vpop.permute.xlu0 %405
    %407 = vrot.lane.b32.xlu0 %v96, 32
    %v408 = vpop.permute.xlu0 %407
    %v414 = vsel %vm104, %v394, 0
    %v417 = vsel %vm104, %v395, 0
    %419 = vmatpush.msra.mxu0 0.0
    %420 = vmatpush.msra.mxu0 0.0
    %421 = vmatpush.msra.mxu0 0.0
    %422 = vmatpush.msra.mxu0 0.0
    %423 = vmatpush.msra.mxu0 0.0
    %424 = vmatpush.msra.mxu0 0.0
    %425 = vmatpush.msra.mxu0 0.0
    %426 = vmatpush.msra.mxu0 0.0
    %427 = vmatpush.msra.mxu0 0.0
    %428 = vmatpush.msra.mxu0 0.0
    %429 = vmatpush.msra.mxu0 0.0
    %430 = vmatpush.msra.mxu0 0.0
    %431 = vmatpush.msra.mxu0 %v408
    %432 = vmatpush.msra.mxu0 %v406
    %433 = vmatpush.msra.mxu0 %v404
    %434 = vmatpush.msra.mxu0 %v402
    %435 = vmatmul.f32.gmra.mxu0 %v414
    %v436 = vpop.f32.mrf.mxu0
    %v437 = vadd.f32 %v396, %v436
    %438 = vmatmul.f32.gmra.mxu0 %v417
    %v439 = vpop.f32.mrf.mxu0
    %v440 = vadd.f32 %v396, %v439
    %441 = vdwg.mxu0
    %443 = vrot.lane.b32.xlu0 %v396, 96
    %v444 = vpop.permute.xlu0 %443
    %v447 = vsel %vm104, %v75, 0
    %v450 = vsel %vm104, %v76, 0
    %452 = vmatpush.msra.mxu0 0.0
    %453 = vmatpush.msra.mxu0 0.0
    %454 = vmatpush.msra.mxu0 0.0
    %455 = vmatpush.msra.mxu0 0.0
    %456 = vmatpush.msra.mxu0 0.0
    %457 = vmatpush.msra.mxu0 0.0
    %458 = vmatpush.msra.mxu0 0.0
    %459 = vmatpush.msra.mxu0 0.0
    %460 = vmatpush.msra.mxu0 0.0
    %461 = vmatpush.msra.mxu0 0.0
    %462 = vmatpush.msra.mxu0 0.0
    %463 = vmatpush.msra.mxu0 0.0
    %464 = vmatpush.msra.mxu0 %v97
    %465 = vmatpush.msra.mxu0 %v94
    %466 = vmatpush.msra.mxu0 %v91
    %467 = vmatpush.msra.mxu0 %v88
    %468 = vmatmul.f32.gmra.mxu0 %v447
    %v469 = vpop.f32.mrf.mxu0
    %v470 = vadd.f32 %v444, %v469
    %471 = vmatmul.f32.gmra.mxu0 %v450
    %v472 = vpop.f32.mrf.mxu0
    %v473 = vadd.f32 %v444, %v472
    %474 = vdwg.mxu0
    %v476 = vsel %vm104, %v437, 0
    %v479 = vsel %vm104, %v470, 0
    %481 = vmatpush.xpose.msra.mxu0 0.0
    %482 = vmatpush.xpose.msra.mxu0 0.0
    %483 = vmatpush.xpose.msra.mxu0 0.0
    %484 = vmatpush.xpose.msra.mxu0 0.0
    %485 = vmatpush.xpose.msra.mxu0 0.0
    %486 = vmatpush.xpose.msra.mxu0 0.0
    %487 = vmatpush.xpose.msra.mxu0 0.0
    %488 = vmatpush.xpose.msra.mxu0 0.0
    %489 = vmatpush.xpose.msra.mxu0 0.0
    %490 = vmatpush.xpose.msra.mxu0 0.0
    %491 = vmatpush.xpose.msra.mxu0 0.0
    %492 = vmatpush.xpose.msra.mxu0 0.0
    %493 = vmatpush.xpose.msra.mxu0 0.0
    %494 = vmatpush.xpose.msra.mxu0 0.0
    %495 = vmatpush.xpose.msra.mxu0 0.0
    %496 = vmatpush.xpose.msra.mxu0 %v479
    %497 = vmatmul.f32.gmra.mxu0 %v476
    %v498 = vpop.f32.mrf.mxu0
    %v499 = vadd.f32 0.0, %v498
    %500 = vdwg.mxu0
    %v502 = vsel %vm104, %v440, 0
    %v505 = vsel %vm104, %v473, 0
    %507 = vmatpush.xpose.msra.mxu0 0.0
    %508 = vmatpush.xpose.msra.mxu0 0.0
    %509 = vmatpush.xpose.msra.mxu0 0.0
    %510 = vmatpush.xpose.msra.mxu0 0.0
    %511 = vmatpush.xpose.msra.mxu0 0.0
    %512 = vmatpush.xpose.msra.mxu0 0.0
    %513 = vmatpush.xpose.msra.mxu0 0.0
    %514 = vmatpush.xpose.msra.mxu0 0.0
    %515 = vmatpush.xpose.msra.mxu0 0.0
    %516 = vmatpush.xpose.msra.mxu0 0.0
    %517 = vmatpush.xpose.msra.mxu0 0.0
    %518 = vmatpush.xpose.msra.mxu0 0.0
    %519 = vmatpush.xpose.msra.mxu0 0.0
    %520 = vmatpush.xpose.msra.mxu0 0.0
    %521 = vmatpush.xpose.msra.mxu0 0.0
    %522 = vmatpush.xpose.msra.mxu0 %v505
    %523 = vmatmul.f32.gmra.mxu0 %v502
    %v524 = vpop.f32.mrf.mxu0
    %v525 = vadd.f32 0.0, %v524
    %526 = vdwg.mxu0
    %v527 = vmul.f32 %v499, 0.17677669
    %v528 = vmul.f32 %v525, 0.17677669
    %v529 = vsel %vm190, %v527, -inf
    %530 = vmax.xlane.f32.xlu0 %v529
    %v531 = vpop.xlane.xlu0 %530
    %v532 = vsel %vm190, %v528, -inf
    %533 = vmax.xlane.f32.xlu0 %v532
    %v534 = vpop.xlane.xlu0 %533
    %v535 = vsub.f32 %v527, %v531
    %v536 = vsub.f32 %v528, %v534
    %v537 = vmul.f32 %v535, 1.442695
    %v538 = vpow.pop %v537
    %v539 = vmul.f32 %v536, 1.442695
    %v540 = vpow.pop %v539
    %v541 = vsel %vm190, %v538, 0.0
    %542 = vadd.xlane.f32.xlu0 %v541
    %v543 = vpop.xlane.xlu0 %542
    %v544 = vsel %vm190, %v540, 0.0
    %545 = vadd.xlane.f32.xlu0 %v544
    %v546 = vpop.xlane.xlu0 %545
    %v547 = vrcp.pop %v543
    %v548 = vmul.f32 %v543, %v547
    %v549 = vsub.f32 1.0, %v548
    %v550 = vmul.f32 %v547, %v549
    %v551 = vadd.f32 %v547, %v550
    %vm552 = vweird.f32 %v543
    %vm553 = vweird.f32 %v547
    %vm554 = vmor %vm552, %vm553
    %v555 = vsel %vm554, %v547, %v551
    %v556 = vand.u32 2147483647, %v543
    %vm557 = vcmp.eq.f32.partialorder %v556, 8.507059e+37
    %v558 = vand.u32 %v543, 2147483648
    %v559 = vor.u32 1.1754944e-38, %v558
    %v560 = vsel %vm557, %v559, %v555
    %v561 = vmul.f32 %v538, %v560
    %v562 = vrcp.pop %v546
    %v563 = vmul.f32 %v546, %v562
    %v564 = vsub.f32 1.0, %v563
    %v565 = vmul.f32 %v562, %v564
    %v566 = vadd.f32 %v562, %v565
    %vm567 = vweird.f32 %v546
    %vm568 = vweird.f32 %v562
    %vm569 = vmor %vm567, %vm568
    %v570 = vsel %vm569, %v562, %v566
    %v571 = vand.u32 2147483647, %v546
    %vm572 = vcmp.eq.f32.partialorder %v571, 8.507059e+37
    %v573 = vand.u32 %v546, 2147483648
    %v574 = vor.u32 1.1754944e-38, %v573
    %v575 = vsel %vm572, %v574, %v570
    %v576 = vmul.f32 %v540, %v575
    %577 = vrot.lane.b32.xlu0 %v470, 96
    %v578 = vpop.permute.xlu0 %577
    %v581 = vsel %vm190, %v561, 0
    %583 = vmatpush.msra.mxu0 0.0
    %584 = vmatpush.msra.mxu0 0.0
    %585 = vmatpush.msra.mxu0 0.0
    %586 = vmatpush.msra.mxu0 0.0
    %587 = vmatpush.msra.mxu0 0.0
    %588 = vmatpush.msra.mxu0 0.0
    %589 = vmatpush.msra.mxu0 0.0
    %590 = vmatpush.msra.mxu0 0.0
    %591 = vmatpush.msra.mxu0 0.0
    %592 = vmatpush.msra.mxu0 0.0
    %593 = vmatpush.msra.mxu0 0.0
    %594 = vmatpush.msra.mxu0 0.0
    %595 = vmatpush.msra.mxu0 0.0
    %596 = vmatpush.msra.mxu0 0.0
    %597 = vmatpush.msra.mxu0 0.0
    %598 = vmatpush.msra.mxu0 %v578
    %599 = vmatmul.f32.gmra.mxu0 %v581
    %v600 = vpop.f32.mrf.mxu0
    %v601 = vadd.f32 0.0, %v600
    %602 = vdwg.mxu0
    %603 = vrot.lane.b32.xlu0 %v473, 96
    %v604 = vpop.permute.xlu0 %603
    %v607 = vsel %vm190, %v576, 0
    %609 = vmatpush.msra.mxu0 0.0
    %610 = vmatpush.msra.mxu0 0.0
    %611 = vmatpush.msra.mxu0 0.0
    %612 = vmatpush.msra.mxu0 0.0
    %613 = vmatpush.msra.mxu0 0.0
    %614 = vmatpush.msra.mxu0 0.0
    %615 = vmatpush.msra.mxu0 0.0
    %616 = vmatpush.msra.mxu0 0.0
    %617 = vmatpush.msra.mxu0 0.0
    %618 = vmatpush.msra.mxu0 0.0
    %619 = vmatpush.msra.mxu0 0.0
    %620 = vmatpush.msra.mxu0 0.0
    %621 = vmatpush.msra.mxu0 0.0
    %622 = vmatpush.msra.mxu0 0.0
    %623 = vmatpush.msra.mxu0 0.0
    %624 = vmatpush.msra.mxu0 %v604
    %625 = vmatmul.f32.gmra.mxu0 %v607
    %v626 = vpop.f32.mrf.mxu0
    %v627 = vadd.f32 0.0, %v626
    %628 = vdwg.mxu0
    %v629 = vperm.slane %v79, 3
    %630 = vrot.lane.b32.xlu0 %v88, 32
    %v631 = vpop.permute.xlu0 %630
    %632 = vrot.lane.b32.xlu0 %v91, 32
    %v633 = vpop.permute.xlu0 %632
    %634 = vrot.lane.b32.xlu0 %v94, 32
    %v635 = vpop.permute.xlu0 %634
    %636 = vrot.lane.b32.xlu0 %v97, 32
    %v637 = vpop.permute.xlu0 %636
    %v643 = vsel %vm104, %v601, 0
    %v646 = vsel %vm104, %v627, 0
    %648 = vmatpush.msra.mxu0 0.0
    %649 = vmatpush.msra.mxu0 0.0
    %650 = vmatpush.msra.mxu0 0.0
    %651 = vmatpush.msra.mxu0 0.0
    %652 = vmatpush.msra.mxu0 0.0
    %653 = vmatpush.msra.mxu0 0.0
    %654 = vmatpush.msra.mxu0 0.0
    %655 = vmatpush.msra.mxu0 0.0
    %656 = vmatpush.msra.mxu0 0.0
    %657 = vmatpush.msra.mxu0 0.0
    %658 = vmatpush.msra.mxu0 0.0
    %659 = vmatpush.msra.mxu0 0.0
    %660 = vmatpush.msra.mxu0 %v637
    %661 = vmatpush.msra.mxu0 %v635
    %662 = vmatpush.msra.mxu0 %v633
    %663 = vmatpush.msra.mxu0 %v631
    %664 = vmatmul.f32.gmra.mxu0 %v643
    %v665 = vpop.f32.mrf.mxu0
    %v666 = vadd.f32 %v629, %v665
    %667 = vmatmul.f32.gmra.mxu0 %v646
    %v668 = vpop.f32.mrf.mxu0
    %v669 = vadd.f32 %v629, %v668
    %670 = vdwg.mxu0
    %v671 = vadd.f32 %v394, %v666
    %v672 = vadd.f32 %v395, %v669
    %v673 = vsel %vm104, %v671, 0.0
    %674 = vadd.xlane.f32.xlu0 %v673
    %v675 = vpop.xlane.xlu0 %674
    %v676 = vsel %vm104, %v672, 0.0
    %677 = vadd.xlane.f32.xlu0 %v676
    %v678 = vpop.xlane.xlu0 %677
    %v679 = vmul.f32 %v675, %v351
    %v680 = vmul.f32 %v678, %v351
    %v681 = vsub.f32 %v671, %v679
    %v682 = vsub.f32 %v672, %v680
    %v683 = vmul.f32 %v681, %v681
    %v684 = vmul.f32 %v682, %v682
    %v685 = vsel %vm104, %v683, 0.0
    %686 = vadd.xlane.f32.xlu0 %v685
    %v687 = vpop.xlane.xlu0 %686
    %v688 = vsel %vm104, %v684, 0.0
    %689 = vadd.xlane.f32.xlu0 %v688
    %v690 = vpop.xlane.xlu0 %689
    %v691 = vmul.f32 %v687, %v351
    %v692 = vmul.f32 %v690, %v351
    %v693 = vadd.f32 %v691, 1e-05
    %v694 = vadd.f32 %v692, 1e-05
    %v695 = vrsqrt.pop %v693
    %v696 = vmul.f32 %v695, %v693
    %v697 = vmul.f32 %v696, %v695
    %v698 = vmul.f32 0.5, %v697
    %v699 = vsub.f32 1.5, %v698
    %v700 = vmul.f32 %v695, %v699
    %vm701 = vweird.f32 %v693
    %vm702 = vweird.f32 %v695
    %vm703 = vmor %vm701, %vm702
    %v704 = vsel %vm703, %v695, %v700
    %v705 = vrsqrt.pop %v694
    %v706 = vmul.f32 %v705, %v694
    %v707 = vmul.f32 %v706, %v705
    %v708 = vmul.f32 0.5, %v707
    %v709 = vsub.f32 1.5, %v708
    %v710 = vmul.f32 %v705, %v709
    %vm711 = vweird.f32 %v694
    %vm712 = vweird.f32 %v705
    %vm713 = vmor %vm711, %vm712
    %v714 = vsel %vm713, %v705, %v710
    %v715 = vmul.f32 %v681, %v704
    %v716 = vmul.f32 %v682, %v714
    %v717 = vperm.slane %v79, 7
    %v718 = vmul.f32 %v715, %v717
    %v719 = vmul.f32 %v716, %v717
    %v720 = vperm.slane %v80, 2
    %v721 = vadd.f32 %v718, %v720
    %v722 = vadd.f32 %v719, %v720
    %v723 = vperm.slane %v79, 4
    %v725 = vsel %vm104, %v721, 0
    %v728 = vsel %vm104, %v722, 0
    %730 = vmatpush.msra.mxu0 0.0
    %731 = vmatpush.msra.mxu0 0.0
    %732 = vmatpush.msra.mxu0 0.0
    %733 = vmatpush.msra.mxu0 0.0
    %734 = vmatpush.msra.mxu0 0.0
    %735 = vmatpush.msra.mxu0 0.0
    %736 = vmatpush.msra.mxu0 0.0
    %737 = vmatpush.msra.mxu0 0.0
    %738 = vmatpush.msra.mxu0 0.0
    %739 = vmatpush.msra.mxu0 0.0
    %740 = vmatpush.msra.mxu0 0.0
    %741 = vmatpush.msra.mxu0 0.0
    %742 = vmatpush.msra.mxu0 %v98
    %743 = vmatpush.msra.mxu0 %v95
    %744 = vmatpush.msra.mxu0 %v92
    %745 = vmatpush.msra.mxu0 %v89
    %746 = vmatmul.f32.gmra.mxu0 %v725
    %v747 = vpop.f32.mrf.mxu0
    %v748 = vadd.f32 %v723, %v747
    %749 = vmatmul.f32.gmra.mxu0 %v728
    %v750 = vpop.f32.mrf.mxu0
    %v751 = vadd.f32 %v723, %v750
    %752 = vdwg.mxu0
    %v753 = vmax.f32 %v748, 0.0
    %v754 = vmax.f32 %v751, 0.0
    %v755 = vperm.slane %v79, 5
    %v757 = vsel %vm104, %v753, 0
    %v760 = vsel %vm104, %v754, 0
    %762 = vmatpush.msra.mxu0 0.0
    %763 = vmatpush.msra.mxu0 0.0
    %764 = vmatpush.msra.mxu0 0.0
    %765 = vmatpush.msra.mxu0 0.0
    %766 = vmatpush.msra.mxu0 0.0
    %767 = vmatpush.msra.mxu0 0.0
    %768 = vmatpush.msra.mxu0 0.0
    %769 = vmatpush.msra.mxu0 0.0
    %770 = vmatpush.msra.mxu0 0.0
    %771 = vmatpush.msra.mxu0 0.0
    %772 = vmatpush.msra.mxu0 0.0
    %773 = vmatpush.msra.mxu0 0.0
    %774 = vmatpush.msra.mxu0 %v102
    %775 = vmatpush.msra.mxu0 %v101
    %776 = vmatpush.msra.mxu0 %v100
    %777 = vmatpush.msra.mxu0 %v99
    %778 = vmatmul.f32.gmra.mxu0 %v757
    %v779 = vpop.f32.mrf.mxu0
    %v780 = vadd.f32 %v755, %v779
    %781 = vmatmul.f32.gmra.mxu0 %v760
    %v782 = vpop.f32.mrf.mxu0
    %v783 = vadd.f32 %v755, %v782
    %784 = vdwg.mxu0
    %v785 = vadd.f32 %v721, %v780
    %v786 = vadd.f32 %v722, %v783
    %v787 = vsel %vm104, %v785, 0.0
    %788 = vadd.xlane.f32.xlu0 %v787
    %v789 = vpop.xlane.xlu0 %788
    %v790 = vsel %vm104, %v786, 0.0
    %791 = vadd.xlane.f32.xlu0 %v790
    %v792 = vpop.xlane.xlu0 %791
    %v793 = vmul.f32 %v789, %v351
    %v794 = vmul.f32 %v792, %v351
    %v795 = vsub.f32 %v785, %v793
    %v796 = vsub.f32 %v786, %v794
    %v797 = vmul.f32 %v795, %v795
    %v798 = vmul.f32 %v796, %v796
    %v799 = vsel %vm104, %v797, 0.0
    %800 = vadd.xlane.f32.xlu0 %v799
    %v801 = vpop.xlane.xlu0 %800
    %v802 = vsel %vm104, %v798, 0.0
    %803 = vadd.xlane.f32.xlu0 %v802
    %v804 = vpop.xlane.xlu0 %803
    %v805 = vmul.f32 %v801, %v351
    %v806 = vmul.f32 %v804, %v351
    %v807 = vadd.f32 %v805, 1e-05
    %v808 = vadd.f32 %v806, 1e-05
    %v809 = vrsqrt.pop %v807
    %v810 = vmul.f32 %v809, %v807
    %v811 = vmul.f32 %v810, %v809
    %v812 = vmul.f32 0.5, %v811
    %v813 = vsub.f32 1.5, %v812
    %v814 = vmul.f32 %v809, %v813
    %vm815 = vweird.f32 %v807
    %vm816 = vweird.f32 %v809
    %vm817 = vmor %vm815, %vm816
    %v818 = vsel %vm817, %v809, %v814
    %v819 = vrsqrt.pop %v808
    %v820 = vmul.f32 %v819, %v808
    %v821 = vmul.f32 %v820, %v819
    %v822 = vmul.f32 0.5, %v821
    %v823 = vsub.f32 1.5, %v822
    %v824 = vmul.f32 %v819, %v823
    %vm825 = vweird.f32 %v808
    %vm826 = vweird.f32 %v819
    %vm827 = vmor %vm825, %vm826
    %v828 = vsel %vm827, %v819, %v824
    %v829 = vmul.f32 %v795, %v818
    %v830 = vmul.f32 %v796, %v828
    %v831 = vperm.slane %v80, 0
    %v832 = vmul.f32 %v829, %v831
    %v833 = vmul.f32 %v830, %v831
    %v834 = vperm.slane %v80, 3
    %v835 = vadd.f32 %v832, %v834
    %v836 = vadd.f32 %v833, %v834
    %s837 = scalar_lea.vmem [#allocation4], 96
    %v838 = vld [vmem:[%s837] sm:$0xff]
    %v839 = vld [vmem:[%s837 + $0x8] sm:$0xff]
    %v840 = vld [vmem:[%s837 + $0x10] sm:$0xff]
    %v841 = vld [vmem:[%s837 + $0x18] sm:$0xff]
    %v842 = vld [vmem:[%s837 + $0x20] sm:$0xff]
    %v843 = vld [vmem:[%s837 + $0x28] sm:$0xff]
    %v844 = vld [vmem:[%s837 + $0x30] sm:$0xff]
    %v845 = vld [vmem:[%s837 + $0x38] sm:$0xff]
    %v846 = vld [vmem:[%s837 + $0x40] sm:$0xff]
    %v847 = vld [vmem:[%s837 + $0x48] sm:$0xff]
    %v848 = vld [vmem:[%s837 + $0x50] sm:$0xff]
    %v849 = vld [vmem:[%s837 + $0x58] sm:$0xff]
    %s850 = scalar_lea.vmem [#allocation6], 32
    %v851 = vld [vmem:[%s850] sm:$0xff]
    %v852 = vld [vmem:[%s850 + $0x8] sm:$0xff]
    %v853 = vld [vmem:[%s850 + $0x10] sm:$0xff]
    %v854 = vld [vmem:[%s850 + $0x18] sm:$0xff]
    %v855 = vperm.slane %v80, 4
    %v857 = vsel %vm104, %v835, 0
    %v860 = vsel %vm104, %v836, 0
    %862 = vmatpush.msra.mxu0 0.0
    %863 = vmatpush.msra.mxu0 0.0
    %864 = vmatpush.msra.mxu0 0.0
    %865 = vmatpush.msra.mxu0 0.0
    %866 = vmatpush.msra.mxu0 0.0
    %867 = vmatpush.msra.mxu0 0.0
    %868 = vmatpush.msra.mxu0 0.0
    %869 = vmatpush.msra.mxu0 0.0
    %870 = vmatpush.msra.mxu0 0.0
    %871 = vmatpush.msra.mxu0 0.0
    %872 = vmatpush.msra.mxu0 0.0
    %873 = vmatpush.msra.mxu0 0.0
    %874 = vmatpush.msra.mxu0 %v847
    %875 = vmatpush.msra.mxu0 %v844
    %876 = vmatpush.msra.mxu0 %v841
    %877 = vmatpush.msra.mxu0 %v838
    %878 = vmatmul.f32.gmra.mxu0 %v857
    %v879 = vpop.f32.mrf.mxu0
    %v880 = vadd.f32 %v855, %v879
    %881 = vmatmul.f32.gmra.mxu0 %v860
    %v882 = vpop.f32.mrf.mxu0
    %v883 = vadd.f32 %v855, %v882
    %884 = vdwg.mxu0
    %886 = vrot.lane.b32.xlu0 %v880, 96
    %v887 = vpop.permute.xlu0 %886
    %v888 = vsel %vm104, %v880, 0
    %v890 = vsel %vm104, %v887, 0
    %892 = vmatpush.xpose.msra.mxu0 0.0
    %893 = vmatpush.xpose.msra.mxu0 0.0
    %894 = vmatpush.xpose.msra.mxu0 0.0
    %895 = vmatpush.xpose.msra.mxu0 0.0
    %896 = vmatpush.xpose.msra.mxu0 0.0
    %897 = vmatpush.xpose.msra.mxu0 0.0
    %898 = vmatpush.xpose.msra.mxu0 0.0
    %899 = vmatpush.xpose.msra.mxu0 0.0
    %900 = vmatpush.xpose.msra.mxu0 0.0
    %901 = vmatpush.xpose.msra.mxu0 0.0
    %902 = vmatpush.xpose.msra.mxu0 0.0
    %903 = vmatpush.xpose.msra.mxu0 0.0
    %904 = vmatpush.xpose.msra.mxu0 0.0
    %905 = vmatpush.xpose.msra.mxu0 0.0
    %906 = vmatpush.xpose.msra.mxu0 0.0
    %907 = vmatpush.xpose.msra.mxu0 %v890
    %908 = vmatmul.f32.gmra.mxu0 %v888
    %v909 = vpop.f32.mrf.mxu0
    %v910 = vadd.f32 0.0, %v909
    %911 = vdwg.mxu0
    %913 = vrot.lane.b32.xlu0 %v883, 96
    %v914 = vpop.permute.xlu0 %913
    %v915 = vsel %vm104, %v883, 0
    %v917 = vsel %vm104, %v914, 0
    %919 = vmatpush.xpose.msra.mxu0 0.0
    %920 = vmatpush.xpose.msra.mxu0 0.0
    %921 = vmatpush.xpose.msra.mxu0 0.0
    %922 = vmatpush.xpose.msra.mxu0 0.0
    %923 = vmatpush.xpose.msra.mxu0 0.0
    %924 = vmatpush.xpose.msra.mxu0 0.0
    %925 = vmatpush.xpose.msra.mxu0 0.0
    %926 = vmatpush.xpose.msra.mxu0 0.0
    %927 = vmatpush.xpose.msra.mxu0 0.0
    %928 = vmatpush.xpose.msra.mxu0 0.0
    %929 = vmatpush.xpose.msra.mxu0 0.0
    %930 = vmatpush.xpose.msra.mxu0 0.0
    %931 = vmatpush.xpose.msra.mxu0 0.0
    %932 = vmatpush.xpose.msra.mxu0 0.0
    %933 = vmatpush.xpose.msra.mxu0 0.0
    %934 = vmatpush.xpose.msra.mxu0 %v917
    %935 = vmatmul.f32.gmra.mxu0 %v915
    %v936 = vpop.f32.mrf.mxu0
    %v937 = vadd.f32 0.0, %v936
    %938 = vdwg.mxu0
    %v939 = vmul.f32 %v910, 0.17677669
    %v940 = vmul.f32 %v937, 0.17677669
    %v941 = vsel %vm190, %v939, -inf
    %942 = vmax.xlane.f32.xlu0 %v941
    %v943 = vpop.xlane.xlu0 %942
    %v944 = vsel %vm190, %v940, -inf
    %945 = vmax.xlane.f32.xlu0 %v944
    %v946 = vpop.xlane.xlu0 %945
    %v947 = vsub.f32 %v939, %v943
    %v948 = vsub.f32 %v940, %v946
    %v949 = vmul.f32 %v947, 1.442695
    %v950 = vpow.pop %v949
    %v951 = vmul.f32 %v948, 1.442695
    %v952 = vpow.pop %v951
    %v953 = vsel %vm190, %v950, 0.0
    %954 = vadd.xlane.f32.xlu0 %v953
    %v955 = vpop.xlane.xlu0 %954
    %v956 = vsel %vm190, %v952, 0.0
    %957 = vadd.xlane.f32.xlu0 %v956
    %v958 = vpop.xlane.xlu0 %957
    %v959 = vrcp.pop %v955
    %v960 = vmul.f32 %v955, %v959
    %v961 = vsub.f32 1.0, %v960
    %v962 = vmul.f32 %v959, %v961
    %v963 = vadd.f32 %v959, %v962
    %vm964 = vweird.f32 %v955
    %vm965 = vweird.f32 %v959
    %vm966 = vmor %vm964, %vm965
    %v967 = vsel %vm966, %v959, %v963
    %v968 = vand.u32 2147483647, %v955
    %vm969 = vcmp.eq.f32.partialorder %v968, 8.507059e+37
    %v970 = vand.u32 %v955, 2147483648
    %v971 = vor.u32 1.1754944e-38, %v970
    %v972 = vsel %vm969, %v971, %v967
    %v973 = vmul.f32 %v950, %v972
    %v974 = vrcp.pop %v958
    %v975 = vmul.f32 %v958, %v974
    %v976 = vsub.f32 1.0, %v975
    %v977 = vmul.f32 %v974, %v976
    %v978 = vadd.f32 %v974, %v977
    %vm979 = vweird.f32 %v958
    %vm980 = vweird.f32 %v974
    %vm981 = vmor %vm979, %vm980
    %v982 = vsel %vm981, %v974, %v978
    %v983 = vand.u32 2147483647, %v958
    %vm984 = vcmp.eq.f32.partialorder %v983, 8.507059e+37
    %v985 = vand.u32 %v958, 2147483648
    %v986 = vor.u32 1.1754944e-38, %v985
    %v987 = vsel %vm984, %v986, %v982
    %v988 = vmul.f32 %v952, %v987
    %989 = vrot.lane.b32.xlu0 %v880, 64
    %v990 = vpop.permute.xlu0 %989
    %v993 = vsel %vm190, %v973, 0
    %995 = vmatpush.msra.mxu0 0.0
    %996 = vmatpush.msra.mxu0 0.0
    %997 = vmatpush.msra.mxu0 0.0
    %998 = vmatpush.msra.mxu0 0.0
    %999 = vmatpush.msra.mxu0 0.0
    %1000 = vmatpush.msra.mxu0 0.0
    %1001 = vmatpush.msra.mxu0 0.0
    %1002 = vmatpush.msra.mxu0 0.0
    %1003 = vmatpush.msra.mxu0 0.0
    %1004 = vmatpush.msra.mxu0 0.0
    %1005 = vmatpush.msra.mxu0 0.0
    %1006 = vmatpush.msra.mxu0 0.0
    %1007 = vmatpush.msra.mxu0 0.0
    %1008 = vmatpush.msra.mxu0 0.0
    %1009 = vmatpush.msra.mxu0 0.0
    %1010 = vmatpush.msra.mxu0 %v990
    %1011 = vmatmul.f32.gmra.mxu0 %v993
    %v1012 = vpop.f32.mrf.mxu0
    %v1013 = vadd.f32 0.0, %v1012
    %1014 = vdwg.mxu0
    %1015 = vrot.lane.b32.xlu0 %v883, 64
    %v1016 = vpop.permute.xlu0 %1015
    %v1019 = vsel %vm190, %v988, 0
    %1021 = vmatpush.msra.mxu0 0.0
    %1022 = vmatpush.msra.mxu0 0.0
    %1023 = vmatpush.msra.mxu0 0.0
    %1024 = vmatpush.msra.mxu0 0.0
    %1025 = vmatpush.msra.mxu0 0.0
    %1026 = vmatpush.msra.mxu0 0.0
    %1027 = vmatpush.msra.mxu0 0.0
    %1028 = vmatpush.msra.mxu0 0.0
    %1029 = vmatpush.msra.mxu0 0.0
    %1030 = vmatpush.msra.mxu0 0.0
    %1031 = vmatpush.msra.mxu0 0.0
    %1032 = vmatpush.msra.mxu0 0.0
    %1033 = vmatpush.msra.mxu0 0.0
    %1034 = vmatpush.msra.mxu0 0.0
    %1035 = vmatpush.msra.mxu0 0.0
    %1036 = vmatpush.msra.mxu0 %v1016
    %1037 = vmatmul.f32.gmra.mxu0 %v1019
    %v1038 = vpop.f32.mrf.mxu0
    %v1039 = vadd.f32 0.0, %v1038
    %1040 = vdwg.mxu0
    %v1041 = vperm.slane %v80, 6
    %1046 = vrot.lane.b32.xlu0 %v839, 64
    %v1047 = vpop.permute.xlu0 %1046
    %1048 = vrot.lane.b32.xlu0 %v842, 64
    %v1049 = vpop.permute.xlu0 %1048
    %1050 = vrot.lane.b32.xlu0 %v845, 64
    %v1051 = vpop.permute.xlu0 %1050
    %1052 = vrot.lane.b32.xlu0 %v848, 64
    %v1053 = vpop.permute.xlu0 %1052
    %v1059 = vsel %vm104, %v1013, 0
    %v1062 = vsel %vm104, %v1039, 0
    %1064 = vmatpush.msra.mxu0 0.0
    %1065 = vmatpush.msra.mxu0 0.0
    %1066 = vmatpush.msra.mxu0 0.0
    %1067 = vmatpush.msra.mxu0 0.0
    %1068 = vmatpush.msra.mxu0 0.0
    %1069 = vmatpush.msra.mxu0 0.0
    %1070 = vmatpush.msra.mxu0 0.0
    %1071 = vmatpush.msra.mxu0 0.0
    %1072 = vmatpush.msra.mxu0 0.0
    %1073 = vmatpush.msra.mxu0 0.0
    %1074 = vmatpush.msra.mxu0 0.0
    %1075 = vmatpush.msra.mxu0 0.0
    %1076 = vmatpush.msra.mxu0 %v1053
    %1077 = vmatpush.msra.mxu0 %v1051
    %1078 = vmatpush.msra.mxu0 %v1049
    %1079 = vmatpush.msra.mxu0 %v1047
    %1080 = vmatmul.f32.gmra.mxu0 %v1059
    %v1081 = vpop.f32.mrf.mxu0
    %v1082 = vadd.f32 %v1041, %v1081
    %1083 = vmatmul.f32.gmra.mxu0 %v1062
    %v1084 = vpop.f32.mrf.mxu0
    %v1085 = vadd.f32 %v1041, %v1084
    %1086 = vdwg.mxu0
    %v1087 = vadd.f32 %v835, %v1082
    %v1088 = vadd.f32 %v836, %v1085
    %v1089 = vsel %vm104, %v1087, 0.0
    %1090 = vadd.xlane.f32.xlu0 %v1089
    %v1091 = vpop.xlane.xlu0 %1090
    %v1092 = vsel %vm104, %v1088, 0.0
    %1093 = vadd.xlane.f32.xlu0 %v1092
    %v1094 = vpop.xlane.xlu0 %1093
    %v1095 = vmul.f32 %v1091, %v351
    %v1096 = vmul.f32 %v1094, %v351
    %v1097 = vsub.f32 %v1087, %v1095
    %v1098 = vsub.f32 %v1088, %v1096
    %v1099 = vmul.f32 %v1097, %v1097
    %v1100 = vmul.f32 %v1098, %v1098
    %v1101 = vsel %vm104, %v1099, 0.0
    %1102 = vadd.xlane.f32.xlu0 %v1101
    %v1103 = vpop.xlane.xlu0 %1102
    %v1104 = vsel %vm104, %v1100, 0.0
    %1105 = vadd.xlane.f32.xlu0 %v1104
    %v1106 = vpop.xlane.xlu0 %1105
    %v1107 = vmul.f32 %v1103, %v351
    %v1108 = vmul.f32 %v1106, %v351
    %v1109 = vadd.f32 %v1107, 1e-05
    %v1110 = vadd.f32 %v1108, 1e-05
    %v1111 = vrsqrt.pop %v1109
    %v1112 = vmul.f32 %v1111, %v1109
    %v1113 = vmul.f32 %v1112, %v1111
    %v1114 = vmul.f32 0.5, %v1113
    %v1115 = vsub.f32 1.5, %v1114
    %v1116 = vmul.f32 %v1111, %v1115
    %vm1117 = vweird.f32 %v1109
    %vm1118 = vweird.f32 %v1111
    %vm1119 = vmor %vm1117, %vm1118
    %v1120 = vsel %vm1119, %v1111, %v1116
    %v1121 = vrsqrt.pop %v1110
    %v1122 = vmul.f32 %v1121, %v1110
    %v1123 = vmul.f32 %v1122, %v1121
    %v1124 = vmul.f32 0.5, %v1123
    %v1125 = vsub.f32 1.5, %v1124
    %v1126 = vmul.f32 %v1121, %v1125
    %vm1127 = vweird.f32 %v1110
    %vm1128 = vweird.f32 %v1121
    %vm1129 = vmor %vm1127, %vm1128
    %v1130 = vsel %vm1129, %v1121, %v1126
    %v1131 = vmul.f32 %v1097, %v1120
    %v1132 = vmul.f32 %v1098, %v1130
    %v1133 = vperm.slane %v81, 2
    %v1134 = vmul.f32 %v1131, %v1133
    %v1135 = vmul.f32 %v1132, %v1133
    %v1136 = vperm.slane %v81, 5
    %v1137 = vadd.f32 %v1134, %v1136
    %v1138 = vadd.f32 %v1135, %v1136
    %v1139 = vperm.slane %v80, 5
    %1144 = vrot.lane.b32.xlu0 %v838, 32
    %v1145 = vpop.permute.xlu0 %1144
    %1146 = vrot.lane.b32.xlu0 %v841, 32
    %v1147 = vpop.permute.xlu0 %1146
    %1148 = vrot.lane.b32.xlu0 %v844, 32
    %v1149 = vpop.permute.xlu0 %1148
    %1150 = vrot.lane.b32.xlu0 %v847, 32
    %v1151 = vpop.permute.xlu0 %1150
    %v1157 = vsel %vm104, %v1137, 0
    %v1160 = vsel %vm104, %v1138, 0
    %1162 = vmatpush.msra.mxu0 0.0
    %1163 = vmatpush.msra.mxu0 0.0
    %1164 = vmatpush.msra.mxu0 0.0
    %1165 = vmatpush.msra.mxu0 0.0
    %1166 = vmatpush.msra.mxu0 0.0
    %1167 = vmatpush.msra.mxu0 0.0
    %1168 = vmatpush.msra.mxu0 0.0
    %1169 = vmatpush.msra.mxu0 0.0
    %1170 = vmatpush.msra.mxu0 0.0
    %1171 = vmatpush.msra.mxu0 0.0
    %1172 = vmatpush.msra.mxu0 0.0
    %1173 = vmatpush.msra.mxu0 0.0
    %1174 = vmatpush.msra.mxu0 %v1151
    %1175 = vmatpush.msra.mxu0 %v1149
    %1176 = vmatpush.msra.mxu0 %v1147
    %1177 = vmatpush.msra.mxu0 %v1145
    %1178 = vmatmul.f32.gmra.mxu0 %v1157
    %v1179 = vpop.f32.mrf.mxu0
    %v1180 = vadd.f32 %v1139, %v1179
    %1181 = vmatmul.f32.gmra.mxu0 %v1160
    %v1182 = vpop.f32.mrf.mxu0
    %v1183 = vadd.f32 %v1139, %v1182
    %1184 = vdwg.mxu0
    %1186 = vrot.lane.b32.xlu0 %v1139, 96
    %v1187 = vpop.permute.xlu0 %1186
    %1189 = vmatpush.msra.mxu0 0.0
    %1190 = vmatpush.msra.mxu0 0.0
    %1191 = vmatpush.msra.mxu0 0.0
    %1192 = vmatpush.msra.mxu0 0.0
    %1193 = vmatpush.msra.mxu0 0.0
    %1194 = vmatpush.msra.mxu0 0.0
    %1195 = vmatpush.msra.mxu0 0.0
    %1196 = vmatpush.msra.mxu0 0.0
    %1197 = vmatpush.msra.mxu0 0.0
    %1198 = vmatpush.msra.mxu0 0.0
    %1199 = vmatpush.msra.mxu0 0.0
    %1200 = vmatpush.msra.mxu0 0.0
    %1201 = vmatpush.msra.mxu0 %v848
    %1202 = vmatpush.msra.mxu0 %v845
    %1203 = vmatpush.msra.mxu0 %v842
    %1204 = vmatpush.msra.mxu0 %v839
    %1205 = vmatmul.f32.gmra.mxu0 %v447
    %v1206 = vpop.f32.mrf.mxu0
    %v1207 = vadd.f32 %v1187, %v1206
    %1208 = vmatmul.f32.gmra.mxu0 %v450
    %v1209 = vpop.f32.mrf.mxu0
    %v1210 = vadd.f32 %v1187, %v1209
    %1211 = vdwg.mxu0
    %v1213 = vsel %vm104, %v1180, 0
    %v1216 = vsel %vm104, %v1207, 0
    %1218 = vmatpush.xpose.msra.mxu0 0.0
    %1219 = vmatpush.xpose.msra.mxu0 0.0
    %1220 = vmatpush.xpose.msra.mxu0 0.0
    %1221 = vmatpush.xpose.msra.mxu0 0.0
    %1222 = vmatpush.xpose.msra.mxu0 0.0
    %1223 = vmatpush.xpose.msra.mxu0 0.0
    %1224 = vmatpush.xpose.msra.mxu0 0.0
    %1225 = vmatpush.xpose.msra.mxu0 0.0
    %1226 = vmatpush.xpose.msra.mxu0 0.0
    %1227 = vmatpush.xpose.msra.mxu0 0.0
    %1228 = vmatpush.xpose.msra.mxu0 0.0
    %1229 = vmatpush.xpose.msra.mxu0 0.0
    %1230 = vmatpush.xpose.msra.mxu0 0.0
    %1231 = vmatpush.xpose.msra.mxu0 0.0
    %1232 = vmatpush.xpose.msra.mxu0 0.0
    %1233 = vmatpush.xpose.msra.mxu0 %v1216
    %1234 = vmatmul.f32.gmra.mxu0 %v1213
    %v1235 = vpop.f32.mrf.mxu0
    %v1236 = vadd.f32 0.0, %v1235
    %1237 = vdwg.mxu0
    %v1239 = vsel %vm104, %v1183, 0
    %v1242 = vsel %vm104, %v1210, 0
    %1244 = vmatpush.xpose.msra.mxu0 0.0
    %1245 = vmatpush.xpose.msra.mxu0 0.0
    %1246 = vmatpush.xpose.msra.mxu0 0.0
    %1247 = vmatpush.xpose.msra.mxu0 0.0
    %1248 = vmatpush.xpose.msra.mxu0 0.0
    %1249 = vmatpush.xpose.msra.mxu0 0.0
    %1250 = vmatpush.xpose.msra.mxu0 0.0
    %1251 = vmatpush.xpose.msra.mxu0 0.0
    %1252 = vmatpush.xpose.msra.mxu0 0.0
    %1253 = vmatpush.xpose.msra.mxu0 0.0
    %1254 = vmatpush.xpose.msra.mxu0 0.0
    %1255 = vmatpush.xpose.msra.mxu0 0.0
    %1256 = vmatpush.xpose.msra.mxu0 0.0
    %1257 = vmatpush.xpose.msra.mxu0 0.0
    %1258 = vmatpush.xpose.msra.mxu0 0.0
    %1259 = vmatpush.xpose.msra.mxu0 %v1242
    %1260 = vmatmul.f32.gmra.mxu0 %v1239
    %v1261 = vpop.f32.mrf.mxu0
    %v1262 = vadd.f32 0.0, %v1261
    %1263 = vdwg.mxu0
    %v1264 = vmul.f32 %v1236, 0.17677669
    %v1265 = vmul.f32 %v1262, 0.17677669
    %v1266 = vsel %vm190, %v1264, -inf
    %1267 = vmax.xlane.f32.xlu0 %v1266
    %v1268 = vpop.xlane.xlu0 %1267
    %v1269 = vsel %vm190, %v1265, -inf
    %1270 = vmax.xlane.f32.xlu0 %v1269
    %v1271 = vpop.xlane.xlu0 %1270
    %v1272 = vsub.f32 %v1264, %v1268
    %v1273 = vsub.f32 %v1265, %v1271
    %v1274 = vmul.f32 %v1272, 1.442695
    %v1275 = vpow.pop %v1274
    %v1276 = vmul.f32 %v1273, 1.442695
    %v1277 = vpow.pop %v1276
    %v1278 = vsel %vm190, %v1275, 0.0
    %1279 = vadd.xlane.f32.xlu0 %v1278
    %v1280 = vpop.xlane.xlu0 %1279
    %v1281 = vsel %vm190, %v1277, 0.0
    %1282 = vadd.xlane.f32.xlu0 %v1281
    %v1283 = vpop.xlane.xlu0 %1282
    %v1284 = vrcp.pop %v1280
    %v1285 = vmul.f32 %v1280, %v1284
    %v1286 = vsub.f32 1.0, %v1285
    %v1287 = vmul.f32 %v1284, %v1286
    %v1288 = vadd.f32 %v1284, %v1287
    %vm1289 = vweird.f32 %v1280
    %vm1290 = vweird.f32 %v1284
    %vm1291 = vmor %vm1289, %vm1290
    %v1292 = vsel %vm1291, %v1284, %v1288
    %v1293 = vand.u32 2147483647, %v1280
    %vm1294 = vcmp.eq.f32.partialorder %v1293, 8.507059e+37
    %v1295 = vand.u32 %v1280, 2147483648
    %v1296 = vor.u32 1.1754944e-38, %v1295
    %v1297 = vsel %vm1294, %v1296, %v1292
    %v1298 = vmul.f32 %v1275, %v1297
    %v1299 = vrcp.pop %v1283
    %v1300 = vmul.f32 %v1283, %v1299
    %v1301 = vsub.f32 1.0, %v1300
    %v1302 = vmul.f32 %v1299, %v1301
    %v1303 = vadd.f32 %v1299, %v1302
    %vm1304 = vweird.f32 %v1283
    %vm1305 = vweird.f32 %v1299
    %vm1306 = vmor %vm1304, %vm1305
    %v1307 = vsel %vm1306, %v1299, %v1303
    %v1308 = vand.u32 2147483647, %v1283
    %vm1309 = vcmp.eq.f32.partialorder %v1308, 8.507059e+37
    %v1310 = vand.u32 %v1283, 2147483648
    %v1311 = vor.u32 1.1754944e-38, %v1310
    %v1312 = vsel %vm1309, %v1311, %v1307
    %v1313 = vmul.f32 %v1277, %v1312
    %1314 = vrot.lane.b32.xlu0 %v1207, 96
    %v1315 = vpop.permute.xlu0 %1314
    %v1318 = vsel %vm190, %v1298, 0
    %1320 = vmatpush.msra.mxu0 0.0
    %1321 = vmatpush.msra.mxu0 0.0
    %1322 = vmatpush.msra.mxu0 0.0
    %1323 = vmatpush.msra.mxu0 0.0
    %1324 = vmatpush.msra.mxu0 0.0
    %1325 = vmatpush.msra.mxu0 0.0
    %1326 = vmatpush.msra.mxu0 0.0
    %1327 = vmatpush.msra.mxu0 0.0
    %1328 = vmatpush.msra.mxu0 0.0
    %1329 = vmatpush.msra.mxu0 0.0
    %1330 = vmatpush.msra.mxu0 0.0
    %1331 = vmatpush.msra.mxu0 0.0
    %1332 = vmatpush.msra.mxu0 0.0
    %1333 = vmatpush.msra.mxu0 0.0
    %1334 = vmatpush.msra.mxu0 0.0
    %1335 = vmatpush.msra.mxu0 %v1315
    %1336 = vmatmul.f32.gmra.mxu0 %v1318
    %v1337 = vpop.f32.mrf.mxu0
    %v1338 = vadd.f32 0.0, %v1337
    %1339 = vdwg.mxu0
    %1340 = vrot.lane.b32.xlu0 %v1210, 96
    %v1341 = vpop.permute.xlu0 %1340
    %v1344 = vsel %vm190, %v1313, 0
    %1346 = vmatpush.msra.mxu0 0.0
    %1347 = vmatpush.msra.mxu0 0.0
    %1348 = vmatpush.msra.mxu0 0.0
    %1349 = vmatpush.msra.mxu0 0.0
    %1350 = vmatpush.msra.mxu0 0.0
    %1351 = vmatpush.msra.mxu0 0.0
    %1352 = vmatpush.msra.mxu0 0.0
    %1353 = vmatpush.msra.mxu0 0.0
    %1354 = vmatpush.msra.mxu0 0.0
    %1355 = vmatpush.msra.mxu0 0.0
    %1356 = vmatpush.msra.mxu0 0.0
    %1357 = vmatpush.msra.mxu0 0.0
    %1358 = vmatpush.msra.mxu0 0.0
    %1359 = vmatpush.msra.mxu0 0.0
    %1360 = vmatpush.msra.mxu0 0.0
    %1361 = vmatpush.msra.mxu0 %v1341
    %1362 = vmatmul.f32.gmra.mxu0 %v1344
    %v1363 = vpop.f32.mrf.mxu0
    %v1364 = vadd.f32 0.0, %v1363
    %1365 = vdwg.mxu0
    %v1366 = vperm.slane %v80, 7
    %1367 = vrot.lane.b32.xlu0 %v839, 32
    %v1368 = vpop.permute.xlu0 %1367
    %1369 = vrot.lane.b32.xlu0 %v842, 32
    %v1370 = vpop.permute.xlu0 %1369
    %1371 = vrot.lane.b32.xlu0 %v845, 32
    %v1372 = vpop.permute.xlu0 %1371
    %1373 = vrot.lane.b32.xlu0 %v848, 32
    %v1374 = vpop.permute.xlu0 %1373
    %v1380 = vsel %vm104, %v1338, 0
    %v1383 = vsel %vm104, %v1364, 0
    %1385 = vmatpush.msra.mxu0 0.0
    %1386 = vmatpush.msra.mxu0 0.0
    %1387 = vmatpush.msra.mxu0 0.0
    %1388 = vmatpush.msra.mxu0 0.0
    %1389 = vmatpush.msra.mxu0 0.0
    %1390 = vmatpush.msra.mxu0 0.0
    %1391 = vmatpush.msra.mxu0 0.0
    %1392 = vmatpush.msra.mxu0 0.0
    %1393 = vmatpush.msra.mxu0 0.0
    %1394 = vmatpush.msra.mxu0 0.0
    %1395 = vmatpush.msra.mxu0 0.0
    %1396 = vmatpush.msra.mxu0 0.0
    %1397 = vmatpush.msra.mxu0 %v1374
    %1398 = vmatpush.msra.mxu0 %v1372
    %1399 = vmatpush.msra.mxu0 %v1370
    %1400 = vmatpush.msra.mxu0 %v1368
    %1401 = vmatmul.f32.gmra.mxu0 %v1380
    %v1402 = vpop.f32.mrf.mxu0
    %v1403 = vadd.f32 %v1366, %v1402
    %1404 = vmatmul.f32.gmra.mxu0 %v1383
    %v1405 = vpop.f32.mrf.mxu0
    %v1406 = vadd.f32 %v1366, %v1405
    %1407 = vdwg.mxu0
    %v1408 = vadd.f32 %v1137, %v1403
    %v1409 = vadd.f32 %v1138, %v1406
    %v1410 = vsel %vm104, %v1408, 0.0
    %1411 = vadd.xlane.f32.xlu0 %v1410
    %v1412 = vpop.xlane.xlu0 %1411
    %v1413 = vsel %vm104, %v1409, 0.0
    %1414 = vadd.xlane.f32.xlu0 %v1413
    %v1415 = vpop.xlane.xlu0 %1414
    %v1416 = vmul.f32 %v1412, %v351
    %v1417 = vmul.f32 %v1415, %v351
    %v1418 = vsub.f32 %v1408, %v1416
    %v1419 = vsub.f32 %v1409, %v1417
    %v1420 = vmul.f32 %v1418, %v1418
    %v1421 = vmul.f32 %v1419, %v1419
    %v1422 = vsel %vm104, %v1420, 0.0
    %1423 = vadd.xlane.f32.xlu0 %v1422
    %v1424 = vpop.xlane.xlu0 %1423
    %v1425 = vsel %vm104, %v1421, 0.0
    %1426 = vadd.xlane.f32.xlu0 %v1425
    %v1427 = vpop.xlane.xlu0 %1426
    %v1428 = vmul.f32 %v1424, %v351
    %v1429 = vmul.f32 %v1427, %v351
    %v1430 = vadd.f32 %v1428, 1e-05
    %v1431 = vadd.f32 %v1429, 1e-05
    %v1432 = vrsqrt.pop %v1430
    %v1433 = vmul.f32 %v1432, %v1430
    %v1434 = vmul.f32 %v1433, %v1432
    %v1435 = vmul.f32 0.5, %v1434
    %v1436 = vsub.f32 1.5, %v1435
    %v1437 = vmul.f32 %v1432, %v1436
    %vm1438 = vweird.f32 %v1430
    %vm1439 = vweird.f32 %v1432
    %vm1440 = vmor %vm1438, %vm1439
    %v1441 = vsel %vm1440, %v1432, %v1437
    %v1442 = vrsqrt.pop %v1431
    %v1443 = vmul.f32 %v1442, %v1431
    %v1444 = vmul.f32 %v1443, %v1442
    %v1445 = vmul.f32 0.5, %v1444
    %v1446 = vsub.f32 1.5, %v1445
    %v1447 = vmul.f32 %v1442, %v1446
    %vm1448 = vweird.f32 %v1431
    %vm1449 = vweird.f32 %v1442
    %vm1450 = vmor %vm1448, %vm1449
    %v1451 = vsel %vm1450, %v1442, %v1447
    %v1452 = vmul.f32 %v1418, %v1441
    %v1453 = vmul.f32 %v1419, %v1451
    %v1454 = vperm.slane %v81, 3
    %v1455 = vmul.f32 %v1452, %v1454
    %v1456 = vmul.f32 %v1453, %v1454
    %v1457 = vperm.slane %v81, 6
    %v1458 = vadd.f32 %v1455, %v1457
    %v1459 = vadd.f32 %v1456, %v1457
    %v1460 = vperm.slane %v81, 0
    %v1462 = vsel %vm104, %v1458, 0
    %v1465 = vsel %vm104, %v1459, 0
    %1467 = vmatpush.msra.mxu0 0.0
    %1468 = vmatpush.msra.mxu0 0.0
    %1469 = vmatpush.msra.mxu0 0.0
    %1470 = vmatpush.msra.mxu0 0.0
    %1471 = vmatpush.msra.mxu0 0.0
    %1472 = vmatpush.msra.mxu0 0.0
    %1473 = vmatpush.msra.mxu0 0.0
    %1474 = vmatpush.msra.mxu0 0.0
    %1475 = vmatpush.msra.mxu0 0.0
    %1476 = vmatpush.msra.mxu0 0.0
    %1477 = vmatpush.msra.mxu0 0.0
    %1478 = vmatpush.msra.mxu0 0.0
    %1479 = vmatpush.msra.mxu0 %v849
    %1480 = vmatpush.msra.mxu0 %v846
    %1481 = vmatpush.msra.mxu0 %v843
    %1482 = vmatpush.msra.mxu0 %v840
    %1483 = vmatmul.f32.gmra.mxu0 %v1462
    %v1484 = vpop.f32.mrf.mxu0
    %v1485 = vadd.f32 %v1460, %v1484
    %1486 = vmatmul.f32.gmra.mxu0 %v1465
    %v1487 = vpop.f32.mrf.mxu0
    %v1488 = vadd.f32 %v1460, %v1487
    %1489 = vdwg.mxu0
    %v1490 = vmax.f32 %v1485, 0.0
    %v1491 = vmax.f32 %v1488, 0.0
    %v1492 = vperm.slane %v81, 1
    %v1494 = vsel %vm104, %v1490, 0
    %v1497 = vsel %vm104, %v1491, 0
    %1499 = vmatpush.msra.mxu0 0.0
    %1500 = vmatpush.msra.mxu0 0.0
    %1501 = vmatpush.msra.mxu0 0.0
    %1502 = vmatpush.msra.mxu0 0.0
    %1503 = vmatpush.msra.mxu0 0.0
    %1504 = vmatpush.msra.mxu0 0.0
    %1505 = vmatpush.msra.mxu0 0.0
    %1506 = vmatpush.msra.mxu0 0.0
    %1507 = vmatpush.msra.mxu0 0.0
    %1508 = vmatpush.msra.mxu0 0.0
    %1509 = vmatpush.msra.mxu0 0.0
    %1510 = vmatpush.msra.mxu0 0.0
    %1511 = vmatpush.msra.mxu0 %v854
    %1512 = vmatpush.msra.mxu0 %v853
    %1513 = vmatpush.msra.mxu0 %v852
    %1514 = vmatpush.msra.mxu0 %v851
    %1515 = vmatmul.f32.gmra.mxu0 %v1494
    %v1516 = vpop.f32.mrf.mxu0
    %v1517 = vadd.f32 %v1492, %v1516
    %1518 = vmatmul.f32.gmra.mxu0 %v1497
    %v1519 = vpop.f32.mrf.mxu0
    %v1520 = vadd.f32 %v1492, %v1519
    %1521 = vdwg.mxu0
    %v1522 = vadd.f32 %v1458, %v1517
    %v1523 = vadd.f32 %v1459, %v1520
    %v1524 = vsel %vm104, %v1522, 0.0
    %1525 = vadd.xlane.f32.xlu0 %v1524
    %v1526 = vpop.xlane.xlu0 %1525
    %v1527 = vsel %vm104, %v1523, 0.0
    %1528 = vadd.xlane.f32.xlu0 %v1527
    %v1529 = vpop.xlane.xlu0 %1528
    %v1530 = vmul.f32 %v1526, %v351
    %v1531 = vmul.f32 %v1529, %v351
    %v1532 = vsub.f32 %v1522, %v1530
    %v1533 = vsub.f32 %v1523, %v1531
    %v1534 = vmul.f32 %v1532, %v1532
    %v1535 = vmul.f32 %v1533, %v1533
    %v1536 = vsel %vm104, %v1534, 0.0
    %1537 = vadd.xlane.f32.xlu0 %v1536
    %v1538 = vpop.xlane.xlu0 %1537
    %v1539 = vsel %vm104, %v1535, 0.0
    %1540 = vadd.xlane.f32.xlu0 %v1539
    %v1541 = vpop.xlane.xlu0 %1540
    %v1542 = vmul.f32 %v1538, %v351
    %v1543 = vmul.f32 %v1541, %v351
    %v1544 = vadd.f32 %v1542, 1e-05
    %v1545 = vadd.f32 %v1543, 1e-05
    %v1546 = vrsqrt.pop %v1544
    %v1547 = vmul.f32 %v1546, %v1544
    %v1548 = vmul.f32 %v1547, %v1546
    %v1549 = vmul.f32 0.5, %v1548
    %v1550 = vsub.f32 1.5, %v1549
    %v1551 = vmul.f32 %v1546, %v1550
    %vm1552 = vweird.f32 %v1544
    %vm1553 = vweird.f32 %v1546
    %vm1554 = vmor %vm1552, %vm1553
    %v1555 = vsel %vm1554, %v1546, %v1551
    %v1556 = vrsqrt.pop %v1545
    %v1557 = vmul.f32 %v1556, %v1545
    %v1558 = vmul.f32 %v1557, %v1556
    %v1559 = vmul.f32 0.5, %v1558
    %v1560 = vsub.f32 1.5, %v1559
    %v1561 = vmul.f32 %v1556, %v1560
    %vm1562 = vweird.f32 %v1545
    %vm1563 = vweird.f32 %v1556
    %vm1564 = vmor %vm1562, %vm1563
    %v1565 = vsel %vm1564, %v1556, %v1561
    %v1566 = vmul.f32 %v1532, %v1555
    %v1567 = vmul.f32 %v1533, %v1565
    %v1568 = vperm.slane %v81, 4
    %v1569 = vmul.f32 %v1566, %v1568
    %v1570 = vmul.f32 %v1567, %v1568
    %v1571 = vperm.slane %v81, 7
    %v1572 = vadd.f32 %v1569, %v1571
    %v1573 = vadd.f32 %v1570, %v1571
    %v1574 = vperm.slane %v82, 0
    %v1576 = vsel %vm104, %v1572, 0
    %v1579 = vsel %vm104, %v1573, 0
    %1581 = vmatpush.msra.mxu0 0.0
    %1582 = vmatpush.msra.mxu0 0.0
    %1583 = vmatpush.msra.mxu0 0.0
    %1584 = vmatpush.msra.mxu0 0.0
    %1585 = vmatpush.msra.mxu0 0.0
    %1586 = vmatpush.msra.mxu0 0.0
    %1587 = vmatpush.msra.mxu0 0.0
    %1588 = vmatpush.msra.mxu0 0.0
    %1589 = vmatpush.msra.mxu0 0.0
    %1590 = vmatpush.msra.mxu0 0.0
    %1591 = vmatpush.msra.mxu0 0.0
    %1592 = vmatpush.msra.mxu0 0.0
    %1593 = vmatpush.msra.mxu0 %v86
    %1594 = vmatpush.msra.mxu0 %v85
    %1595 = vmatpush.msra.mxu0 %v84
    %1596 = vmatpush.msra.mxu0 %v83
    %1597 = vmatmul.f32.gmra.mxu0 %v1576
    %v1598 = vpop.f32.mrf.mxu0
    %v1599 = vadd.f32 %v1574, %v1598
    %1600 = vmatmul.f32.gmra.mxu0 %v1579
    %v1601 = vpop.f32.mrf.mxu0
    %v1602 = vadd.f32 %v1574, %v1601
    %1603 = vdwg.mxu0
    %1606 = vrot.lane.b32.xlu0 %v1599, 1
    %v1607 = vpop.permute.xlu0 %1606
    %1608 = vrot.lane.b32.xlu0 %v1602, 1
    %v1609 = vpop.permute.xlu0 %1608
    %v1612 = vsub.f32 %v1599, %v1607
    %v1613 = vsub.f32 %v1602, %v1609
    %v1614 = vxor.u32 %v1612, 2147483648
    %v1615 = vxor.u32 %v1613, 2147483648
    %v1616 = vmul.f32 %v1614, 1.442695
    %v1617 = vpow.pop %v1616
    %v1618 = vmul.f32 %v1615, 1.442695
    %v1619 = vpow.pop %v1618
    %v1620 = vadd.f32 %v1617, 1.0
    %v1621 = vadd.f32 %v1619, 1.0
    %v1622 = vrcp.pop %v1620
    %v1623 = vmul.f32 %v1620, %v1622
    %v1624 = vsub.f32 1.0, %v1623
    %v1625 = vmul.f32 %v1622, %v1624
    %v1626 = vadd.f32 %v1622, %v1625
    %vm1627 = vweird.f32 %v1620
    %vm1628 = vweird.f32 %v1622
    %vm1629 = vmor %vm1627, %vm1628
    %v1630 = vsel %vm1629, %v1622, %v1626
    %v1631 = vand.u32 2147483647, %v1620
    %vm1632 = vcmp.eq.f32.partialorder %v1631, 8.507059e+37
    %v1633 = vand.u32 %v1620, 2147483648
    %v1634 = vor.u32 1.1754944e-38, %v1633
    %v1635 = vsel %vm1632, %v1634, %v1630
    %v1636 = vmul.f32 1.0, %v1635
    %v1637 = vrcp.pop %v1621
    %v1638 = vmul.f32 %v1621, %v1637
    %v1639 = vsub.f32 1.0, %v1638
    %v1640 = vmul.f32 %v1637, %v1639
    %v1641 = vadd.f32 %v1637, %v1640
    %vm1642 = vweird.f32 %v1621
    %vm1643 = vweird.f32 %v1637
    %vm1644 = vmor %vm1642, %vm1643
    %v1645 = vsel %vm1644, %v1637, %v1641
    %v1646 = vand.u32 2147483647, %v1621
    %vm1647 = vcmp.eq.f32.partialorder %v1646, 8.507059e+37
    %v1648 = vand.u32 %v1621, 2147483648
    %v1649 = vor.u32 1.1754944e-38, %v1648
    %v1650 = vsel %vm1647, %v1649, %v1645
    %v1651 = vmul.f32 1.0, %v1650
    %1654 = vrot.lane.b32.xlu0 %v77, 127
    %v1655 = vpop.permute.xlu0 %1654
    %1656 = vrot.lane.b32.xlu0 %v78, 127
    %v1657 = vpop.permute.xlu0 %1656
    %v1660 = vsub.f32 %v77, %v1655
    %v1661 = vsub.f32 %v78, %v1657
    %1664 = vrot.lane.b32.xlu0 %v1660, 1
    %v1665 = vpop.permute.xlu0 %1664
    %1666 = vrot.lane.b32.xlu0 %v1661, 1
    %v1667 = vpop.permute.xlu0 %1666
    %vm1670 = vcmp.gt.f32.partialorder %v1612, %v1665
    %vm1671 = vcmp.gt.f32.partialorder %v1613, %v1667
    %v1672 = vsel %vm1670, 1, 0
    %v1673 = vsel %vm1671, 1, 0
    %v1674 = vcvt.s32.f32 %v1672
    %v1675 = vcvt.s32.f32 %v1673
    %1678 = vrot.lane.b32.xlu0 %v1636, 127
    %v1679 = vpop.permute.xlu0 %1678
    %1680 = vrot.lane.b32.xlu0 %v1651, 127
    %v1681 = vpop.permute.xlu0 %1680
    %vm1684 = vcmask 7168
    %v1685 = vsel %vm1684, %v1679, %v1674
    %v1686 = vsel %vm1684, %v1681, %v1675
    %vm1687 = vcmask 15360
    %1688 = vst.msk [vmem:[%s7] sm:$0xff] %vm1687, %v1685
    %1689 = vst.msk [vmem:[%s7 + $0x8] sm:$0xff] %vm1687, %v1686
    // Predicated region
    $region42: #{tpu_custom_call.1} parent=1 // pred_check
      _
    $region43: #{tpu_custom_call.1} parent=1 // pred_check_branch
      %1691 = sbr.rel (0) target = $region45
    $region44: #{tpu_custom_call.1} parent=1 // pred_region
      _
    $region45: #{tpu_custom_call.1} parent=1 // pred_fallthru
      _
    // Predicated region
    $region46: #{tpu_custom_call.1} parent=1 // pred_check
      _
    $region47: #{tpu_custom_call.1} parent=1 // pred_check_branch
      %1693 = sbr.rel (0) target = $region49
    $region48: #{tpu_custom_call.1} parent=1 // pred_region
      _
    $region49: #{tpu_custom_call.1} parent=1 // pred_fallthru
      _
    %1694 = vsyncpa [#allocation3], 1
    %1695 = vsyncpa [#allocation5], 1

</llo_original>
